<compile_context>
chip_gen: v7x
topology: tpu7x:2x2x1
jax: 0.10.0
libtpu: 0.0.40
codegen_flags: <defaults>
</compile_context>

<pallas_src>
import jax
import jax.numpy as jnp
import numpy as np
from jax import lax
from jax.experimental import pallas as pl
from jax.experimental.pallas import tpu as pltpu


def _conv1x1_rows(w_ref, xin, out_ch, in_ch):
    """out_ch rows of shape (1, L): row o = sum_i W[o, i] * xin[i, :].
    Pure VPU FMAs with scalar weights read from SMEM (a (L,4)x(4,2) matmul would use
    <1% of the MXU and pay push/pop latency)."""
    rows = []
    for o in range(out_ch):
        acc = w_ref[o, 0] * xin[0:1, :]
        for i in range(1, in_ch):
            acc = acc + w_ref[o, i] * xin[i:i + 1, :]
        rows.append(acc)
    return rows


def _nonlocal_kernel(x_ref, wphi_ref, wtheta_ref, wg_ref, wmask_ref, o_ref):
    C, M = x_ref.shape
    IC = C // 2
    K = M // 2          # PyTorch's .view(b, c, -1) makes the "sequence" length h*w/2

    x = x_ref[...]                       # (C, M), lane-dense
    xl = x[:, :K]                        # spatial first half  (r = 0), 128-aligned slice
    xr = x[:, K:]                        # spatial second half (r = 1)

    # phi/theta/g rows in order p' = r*IC + o (a fixed permutation of PyTorch's channel
    # order p = 2*o + r). The theta^T @ phi contraction is invariant to a permutation
    # applied consistently to all three projections; the final mask conv below indexes
    # the r-blocks of y explicitly, so the permutation is fully accounted for.
    def proj(w_ref):
        return jnp.concatenate(
            _conv1x1_rows(w_ref, xl, IC, C) + _conv1x1_rows(w_ref, xr, IC, C), axis=0)

    phi = proj(wphi_ref)                 # (C, K)
    theta = proj(wtheta_ref)             # (C, K)
    g = proj(wg_ref)                     # (C, K)

    # attn[i, j] = sum_p theta[p, i] * phi[p, j]   (== x_theta @ x_phi in PyTorch)
    attn = lax.dot_general(theta, phi, (((0,), (0,)), ((), ())),
                           preferred_element_type=jnp.float32)      # (K, K)

    # Softmax(dim=1) of the (b, K, K) tensor == axis 0 here (column-normalized).
    mx = jnp.max(attn, axis=0, keepdims=True)
    e = jnp.exp(attn - mx)
    attn = e / jnp.sum(e, axis=0, keepdims=True)

    # y[p', i] = sum_j g[p', j] * attn[i, j]   (== (attn @ x_g)^T, already channel-major)
    y = lax.dot_general(g, attn, (((1,), (1,)), ((), ())),
                        preferred_element_type=jnp.float32)         # (C, K)

    # PyTorch permute + .view(b, c/2, h, w): channel o, spatial r*K + i  <->  y[r*IC + o, i].
    # 1x1 mask conv (c/2 -> c) per spatial half, then residual add; 128-aligned stores.
    mask_l = jnp.concatenate(_conv1x1_rows(wmask_ref, y[0:IC, :], C, IC), axis=0)
    mask_r = jnp.concatenate(_conv1x1_rows(wmask_ref, y[IC:, :], C, IC), axis=0)
    o_ref[:, :K] = xl + mask_l
    o_ref[:, K:] = xr + mask_r


def nonlocal_block(x_nchw, w_phi, w_theta, w_g, w_mask):
    """x_nchw: (N, C, H, W) float32.
    w_phi/w_theta/w_g: (C//2, C); w_mask: (C, C//2)  (PyTorch 1x1 Conv2d weights with the
    trailing 1x1 kernel dims squeezed)."""
    N, C, H, W = x_nchw.shape
    M = H * W
    assert C % 2 == 0 and M % 2 == 0
    x = x_nchw.reshape(N, C, M).astype(jnp.float32)   # lane-dense (..., H*W); free reshape

    f32 = lambda a: a.astype(jnp.float32)
    smem = pl.BlockSpec(memory_space=pltpu.MemorySpace.SMEM)
    blk = pl.BlockSpec((None, C, M), lambda b: (b, 0, 0))

    out = pl.pallas_call(
        _nonlocal_kernel,
        out_shape=jax.ShapeDtypeStruct((N, C, M), jnp.float32),
        grid=(N,),
        in_specs=[blk, smem, smem, smem, smem],
        out_specs=blk,
        input_output_aliases={0: 0},                       # out = x + mask: reuse x buffer
        compiler_params=pltpu.CompilerParams(
            dimension_semantics=("parallel",)),            # batch across TCs on v7x
    )(x, f32(w_phi), f32(w_theta), f32(w_g), f32(w_mask))

    return out.reshape(N, C, H, W)


def _reference(x, w_phi, w_theta, w_g, w_mask):
    """Pure-JAX transcription of the PyTorch forward (including its .view quirks)."""
    b, c, h, w = x.shape
    ic = c // 2
    conv = lambda xin, wm: jnp.einsum('oi,bihw->bohw', wm, xin)
    x_phi = conv(x, w_phi).reshape(b, c, -1)                                   # (b, c, hw/2)
    x_theta = jnp.transpose(conv(x, w_theta).reshape(b, c, -1), (0, 2, 1))     # (b, hw/2, c)
    x_g = jnp.transpose(conv(x, w_g).reshape(b, c, -1), (0, 2, 1))             # (b, hw/2, c)
    attn = jnp.einsum('bkc,bcj->bkj', x_theta, x_phi)                          # (b, hw/2, hw/2)
    attn = jax.nn.softmax(attn, axis=1)                                        # Softmax(dim=1)
    y = jnp.einsum('bkj,bjc->bkc', attn, x_g)                                  # (b, hw/2, c)
    y = jnp.transpose(y, (0, 2, 1)).reshape(b, ic, h, w)
    return conv(y, w_mask) + x


if __name__ == "__main__":
    N, C, H, W = 2, 4, 16, 16
    IC = C // 2
    key = jax.random.PRNGKey(0)
    kx, k1, k2, k3, k4 = jax.random.split(key, 5)

    x = jax.random.normal(kx, (N, C, H, W), jnp.float32)
    w_phi = 0.3 * jax.random.normal(k1, (IC, C), jnp.float32)
    w_theta = 0.3 * jax.random.normal(k2, (IC, C), jnp.float32)
    w_g = 0.3 * jax.random.normal(k3, (IC, C), jnp.float32)
    w_mask = 0.3 * jax.random.normal(k4, (C, IC), jnp.float32)

    out = jax.block_until_ready(nonlocal_block(x, w_phi, w_theta, w_g, w_mask))
    ref = _reference(x, w_phi, w_theta, w_g, w_mask)

    assert out.shape == (N, C, H, W)
    np.testing.assert_allclose(np.asarray(out), np.asarray(ref), atol=2e-3, rtol=2e-3)
    print("KERNEL_OK")
</pallas_src>

<mosaic_0001>
module attributes {stable_mosaic.version = 11 : i64} {
  func.func @_nonlocal_kernel(%arg0: i32, %arg1: memref<1x4x256xf32, #tpu.memory_space<vmem>>, %arg2: memref<2x4xf32, #tpu.memory_space<smem>>, %arg3: memref<2x4xf32, #tpu.memory_space<smem>>, %arg4: memref<2x4xf32, #tpu.memory_space<smem>>, %arg5: memref<4x2xf32, #tpu.memory_space<smem>>, %arg6: memref<1x4x256xf32, #tpu.memory_space<vmem>>) attributes {dimension_semantics = [#tpu.dimension_semantics<parallel>], iteration_bounds = array<i64: 2>, scalar_prefetch = 0 : i64, scratch_operands = 0 : i64, tpu.core_type = #tpu.core_type<tc>, window_params = [{transform_indices = @transform_0, window_bounds = array<i64: 1, 4, 256>}, {transform_indices = @transform_1, window_bounds = array<i64: 2, 4>}, {transform_indices = @transform_2, window_bounds = array<i64: 2, 4>}, {transform_indices = @transform_3, window_bounds = array<i64: 2, 4>}, {transform_indices = @transform_4, window_bounds = array<i64: 4, 2>}, {transform_indices = @transform_5, window_bounds = array<i64: 1, 4, 256>}]} {
    %c0 = arith.constant 0 : index
    %c0_0 = arith.constant 0 : index
    %c0_1 = arith.constant 0 : index
    %0 = vector.load %arg1[%c0, %c0_0, %c0_1] : memref<1x4x256xf32, #tpu.memory_space<vmem>>, vector<1x4x256xf32>
    %1 = vector.shape_cast %0 : vector<1x4x256xf32> to vector<4x256xf32>
    %2 = vector.extract_strided_slice %1 {offsets = [0, 0], sizes = [4, 128], strides = [1, 1]} : vector<4x256xf32> to vector<4x128xf32>
    %3 = vector.extract_strided_slice %1 {offsets = [0, 128], sizes = [4, 128], strides = [1, 1]} : vector<4x256xf32> to vector<4x128xf32>
    %c0_2 = arith.constant 0 : index
    %c0_3 = arith.constant 0 : index
    %4 = memref.load %arg2[%c0_2, %c0_3] : memref<2x4xf32, #tpu.memory_space<smem>>
    %5 = vector.extract_strided_slice %2 {offsets = [0, 0], sizes = [1, 128], strides = [1, 1]} : vector<4x128xf32> to vector<1x128xf32>
    %6 = vector.broadcast %4 : f32 to vector<1x128xf32>
    %7 = arith.mulf %6, %5 : vector<1x128xf32>
    %c0_4 = arith.constant 0 : index
    %c1 = arith.constant 1 : index
    %8 = memref.load %arg2[%c0_4, %c1] : memref<2x4xf32, #tpu.memory_space<smem>>
    %9 = vector.extract_strided_slice %2 {offsets = [1, 0], sizes = [1, 128], strides = [1, 1]} : vector<4x128xf32> to vector<1x128xf32>
    %10 = vector.broadcast %8 : f32 to vector<1x128xf32>
    %11 = arith.mulf %10, %9 : vector<1x128xf32>
    %12 = arith.addf %7, %11 : vector<1x128xf32>
    %c0_5 = arith.constant 0 : index
    %c2 = arith.constant 2 : index
    %13 = memref.load %arg2[%c0_5, %c2] : memref<2x4xf32, #tpu.memory_space<smem>>
    %14 = vector.extract_strided_slice %2 {offsets = [2, 0], sizes = [1, 128], strides = [1, 1]} : vector<4x128xf32> to vector<1x128xf32>
    %15 = vector.broadcast %13 : f32 to vector<1x128xf32>
    %16 = arith.mulf %15, %14 : vector<1x128xf32>
    %17 = arith.addf %12, %16 : vector<1x128xf32>
    %c0_6 = arith.constant 0 : index
    %c3 = arith.constant 3 : index
    %18 = memref.load %arg2[%c0_6, %c3] : memref<2x4xf32, #tpu.memory_space<smem>>
    %19 = vector.extract_strided_slice %2 {offsets = [3, 0], sizes = [1, 128], strides = [1, 1]} : vector<4x128xf32> to vector<1x128xf32>
    %20 = vector.broadcast %18 : f32 to vector<1x128xf32>
    %21 = arith.mulf %20, %19 : vector<1x128xf32>
    %22 = arith.addf %17, %21 : vector<1x128xf32>
    %c1_7 = arith.constant 1 : index
    %c0_8 = arith.constant 0 : index
    %23 = memref.load %arg2[%c1_7, %c0_8] : memref<2x4xf32, #tpu.memory_space<smem>>
    %24 = vector.extract_strided_slice %2 {offsets = [0, 0], sizes = [1, 128], strides = [1, 1]} : vector<4x128xf32> to vector<1x128xf32>
    %25 = vector.broadcast %23 : f32 to vector<1x128xf32>
    %26 = arith.mulf %25, %24 : vector<1x128xf32>
    %c1_9 = arith.constant 1 : index
    %c1_10 = arith.constant 1 : index
    %27 = memref.load %arg2[%c1_9, %c1_10] : memref<2x4xf32, #tpu.memory_space<smem>>
    %28 = vector.extract_strided_slice %2 {offsets = [1, 0], sizes = [1, 128], strides = [1, 1]} : vector<4x128xf32> to vector<1x128xf32>
    %29 = vector.broadcast %27 : f32 to vector<1x128xf32>
    %30 = arith.mulf %29, %28 : vector<1x128xf32>
    %31 = arith.addf %26, %30 : vector<1x128xf32>
    %c1_11 = arith.constant 1 : index
    %c2_12 = arith.constant 2 : index
    %32 = memref.load %arg2[%c1_11, %c2_12] : memref<2x4xf32, #tpu.memory_space<smem>>
    %33 = vector.extract_strided_slice %2 {offsets = [2, 0], sizes = [1, 128], strides = [1, 1]} : vector<4x128xf32> to vector<1x128xf32>
    %34 = vector.broadcast %32 : f32 to vector<1x128xf32>
    %35 = arith.mulf %34, %33 : vector<1x128xf32>
    %36 = arith.addf %31, %35 : vector<1x128xf32>
    %c1_13 = arith.constant 1 : index
    %c3_14 = arith.constant 3 : index
    %37 = memref.load %arg2[%c1_13, %c3_14] : memref<2x4xf32, #tpu.memory_space<smem>>
    %38 = vector.extract_strided_slice %2 {offsets = [3, 0], sizes = [1, 128], strides = [1, 1]} : vector<4x128xf32> to vector<1x128xf32>
    %39 = vector.broadcast %37 : f32 to vector<1x128xf32>
    %40 = arith.mulf %39, %38 : vector<1x128xf32>
    %41 = arith.addf %36, %40 : vector<1x128xf32>
    %c0_15 = arith.constant 0 : index
    %c0_16 = arith.constant 0 : index
    %42 = memref.load %arg2[%c0_15, %c0_16] : memref<2x4xf32, #tpu.memory_space<smem>>
    %43 = vector.extract_strided_slice %3 {offsets = [0, 0], sizes = [1, 128], strides = [1, 1]} : vector<4x128xf32> to vector<1x128xf32>
    %44 = vector.broadcast %42 : f32 to vector<1x128xf32>
    %45 = arith.mulf %44, %43 : vector<1x128xf32>
    %c0_17 = arith.constant 0 : index
    %c1_18 = arith.constant 1 : index
    %46 = memref.load %arg2[%c0_17, %c1_18] : memref<2x4xf32, #tpu.memory_space<smem>>
    %47 = vector.extract_strided_slice %3 {offsets = [1, 0], sizes = [1, 128], strides = [1, 1]} : vector<4x128xf32> to vector<1x128xf32>
    %48 = vector.broadcast %46 : f32 to vector<1x128xf32>
    %49 = arith.mulf %48, %47 : vector<1x128xf32>
    %50 = arith.addf %45, %49 : vector<1x128xf32>
    %c0_19 = arith.constant 0 : index
    %c2_20 = arith.constant 2 : index
    %51 = memref.load %arg2[%c0_19, %c2_20] : memref<2x4xf32, #tpu.memory_space<smem>>
    %52 = vector.extract_strided_slice %3 {offsets = [2, 0], sizes = [1, 128], strides = [1, 1]} : vector<4x128xf32> to vector<1x128xf32>
    %53 = vector.broadcast %51 : f32 to vector<1x128xf32>
    %54 = arith.mulf %53, %52 : vector<1x128xf32>
    %55 = arith.addf %50, %54 : vector<1x128xf32>
    %c0_21 = arith.constant 0 : index
    %c3_22 = arith.constant 3 : index
    %56 = memref.load %arg2[%c0_21, %c3_22] : memref<2x4xf32, #tpu.memory_space<smem>>
    %57 = vector.extract_strided_slice %3 {offsets = [3, 0], sizes = [1, 128], strides = [1, 1]} : vector<4x128xf32> to vector<1x128xf32>
    %58 = vector.broadcast %56 : f32 to vector<1x128xf32>
    %59 = arith.mulf %58, %57 : vector<1x128xf32>
    %60 = arith.addf %55, %59 : vector<1x128xf32>
    %c1_23 = arith.constant 1 : index
    %c0_24 = arith.constant 0 : index
    %61 = memref.load %arg2[%c1_23, %c0_24] : memref<2x4xf32, #tpu.memory_space<smem>>
    %62 = vector.extract_strided_slice %3 {offsets = [0, 0], sizes = [1, 128], strides = [1, 1]} : vector<4x128xf32> to vector<1x128xf32>
    %63 = vector.broadcast %61 : f32 to vector<1x128xf32>
    %64 = arith.mulf %63, %62 : vector<1x128xf32>
    %c1_25 = arith.constant 1 : index
    %c1_26 = arith.constant 1 : index
    %65 = memref.load %arg2[%c1_25, %c1_26] : memref<2x4xf32, #tpu.memory_space<smem>>
    %66 = vector.extract_strided_slice %3 {offsets = [1, 0], sizes = [1, 128], strides = [1, 1]} : vector<4x128xf32> to vector<1x128xf32>
    %67 = vector.broadcast %65 : f32 to vector<1x128xf32>
    %68 = arith.mulf %67, %66 : vector<1x128xf32>
    %69 = arith.addf %64, %68 : vector<1x128xf32>
    %c1_27 = arith.constant 1 : index
    %c2_28 = arith.constant 2 : index
    %70 = memref.load %arg2[%c1_27, %c2_28] : memref<2x4xf32, #tpu.memory_space<smem>>
    %71 = vector.extract_strided_slice %3 {offsets = [2, 0], sizes = [1, 128], strides = [1, 1]} : vector<4x128xf32> to vector<1x128xf32>
    %72 = vector.broadcast %70 : f32 to vector<1x128xf32>
    %73 = arith.mulf %72, %71 : vector<1x128xf32>
    %74 = arith.addf %69, %73 : vector<1x128xf32>
    %c1_29 = arith.constant 1 : index
    %c3_30 = arith.constant 3 : index
    %75 = memref.load %arg2[%c1_29, %c3_30] : memref<2x4xf32, #tpu.memory_space<smem>>
    %76 = vector.extract_strided_slice %3 {offsets = [3, 0], sizes = [1, 128], strides = [1, 1]} : vector<4x128xf32> to vector<1x128xf32>
    %77 = vector.broadcast %75 : f32 to vector<1x128xf32>
    %78 = arith.mulf %77, %76 : vector<1x128xf32>
    %79 = arith.addf %74, %78 : vector<1x128xf32>
    %80 = tpu.concatenate %22, %41, %60, %79 in 0 : vector<1x128xf32>, vector<1x128xf32>, vector<1x128xf32>, vector<1x128xf32> -> vector<4x128xf32>
    %c0_31 = arith.constant 0 : index
    %c0_32 = arith.constant 0 : index
    %81 = memref.load %arg3[%c0_31, %c0_32] : memref<2x4xf32, #tpu.memory_space<smem>>
    %82 = vector.extract_strided_slice %2 {offsets = [0, 0], sizes = [1, 128], strides = [1, 1]} : vector<4x128xf32> to vector<1x128xf32>
    %83 = vector.broadcast %81 : f32 to vector<1x128xf32>
    %84 = arith.mulf %83, %82 : vector<1x128xf32>
    %c0_33 = arith.constant 0 : index
    %c1_34 = arith.constant 1 : index
    %85 = memref.load %arg3[%c0_33, %c1_34] : memref<2x4xf32, #tpu.memory_space<smem>>
    %86 = vector.extract_strided_slice %2 {offsets = [1, 0], sizes = [1, 128], strides = [1, 1]} : vector<4x128xf32> to vector<1x128xf32>
    %87 = vector.broadcast %85 : f32 to vector<1x128xf32>
    %88 = arith.mulf %87, %86 : vector<1x128xf32>
    %89 = arith.addf %84, %88 : vector<1x128xf32>
    %c0_35 = arith.constant 0 : index
    %c2_36 = arith.constant 2 : index
    %90 = memref.load %arg3[%c0_35, %c2_36] : memref<2x4xf32, #tpu.memory_space<smem>>
    %91 = vector.extract_strided_slice %2 {offsets = [2, 0], sizes = [1, 128], strides = [1, 1]} : vector<4x128xf32> to vector<1x128xf32>
    %92 = vector.broadcast %90 : f32 to vector<1x128xf32>
    %93 = arith.mulf %92, %91 : vector<1x128xf32>
    %94 = arith.addf %89, %93 : vector<1x128xf32>
    %c0_37 = arith.constant 0 : index
    %c3_38 = arith.constant 3 : index
    %95 = memref.load %arg3[%c0_37, %c3_38] : memref<2x4xf32, #tpu.memory_space<smem>>
    %96 = vector.extract_strided_slice %2 {offsets = [3, 0], sizes = [1, 128], strides = [1, 1]} : vector<4x128xf32> to vector<1x128xf32>
    %97 = vector.broadcast %95 : f32 to vector<1x128xf32>
    %98 = arith.mulf %97, %96 : vector<1x128xf32>
    %99 = arith.addf %94, %98 : vector<1x128xf32>
    %c1_39 = arith.constant 1 : index
    %c0_40 = arith.constant 0 : index
    %100 = memref.load %arg3[%c1_39, %c0_40] : memref<2x4xf32, #tpu.memory_space<smem>>
    %101 = vector.extract_strided_slice %2 {offsets = [0, 0], sizes = [1, 128], strides = [1, 1]} : vector<4x128xf32> to vector<1x128xf32>
    %102 = vector.broadcast %100 : f32 to vector<1x128xf32>
    %103 = arith.mulf %102, %101 : vector<1x128xf32>
    %c1_41 = arith.constant 1 : index
    %c1_42 = arith.constant 1 : index
    %104 = memref.load %arg3[%c1_41, %c1_42] : memref<2x4xf32, #tpu.memory_space<smem>>
    %105 = vector.extract_strided_slice %2 {offsets = [1, 0], sizes = [1, 128], strides = [1, 1]} : vector<4x128xf32> to vector<1x128xf32>
    %106 = vector.broadcast %104 : f32 to vector<1x128xf32>
    %107 = arith.mulf %106, %105 : vector<1x128xf32>
    %108 = arith.addf %103, %107 : vector<1x128xf32>
    %c1_43 = arith.constant 1 : index
    %c2_44 = arith.constant 2 : index
    %109 = memref.load %arg3[%c1_43, %c2_44] : memref<2x4xf32, #tpu.memory_space<smem>>
    %110 = vector.extract_strided_slice %2 {offsets = [2, 0], sizes = [1, 128], strides = [1, 1]} : vector<4x128xf32> to vector<1x128xf32>
    %111 = vector.broadcast %109 : f32 to vector<1x128xf32>
    %112 = arith.mulf %111, %110 : vector<1x128xf32>
    %113 = arith.addf %108, %112 : vector<1x128xf32>
    %c1_45 = arith.constant 1 : index
    %c3_46 = arith.constant 3 : index
    %114 = memref.load %arg3[%c1_45, %c3_46] : memref<2x4xf32, #tpu.memory_space<smem>>
    %115 = vector.extract_strided_slice %2 {offsets = [3, 0], sizes = [1, 128], strides = [1, 1]} : vector<4x128xf32> to vector<1x128xf32>
    %116 = vector.broadcast %114 : f32 to vector<1x128xf32>
    %117 = arith.mulf %116, %115 : vector<1x128xf32>
    %118 = arith.addf %113, %117 : vector<1x128xf32>
    %c0_47 = arith.constant 0 : index
    %c0_48 = arith.constant 0 : index
    %119 = memref.load %arg3[%c0_47, %c0_48] : memref<2x4xf32, #tpu.memory_space<smem>>
    %120 = vector.extract_strided_slice %3 {offsets = [0, 0], sizes = [1, 128], strides = [1, 1]} : vector<4x128xf32> to vector<1x128xf32>
    %121 = vector.broadcast %119 : f32 to vector<1x128xf32>
    %122 = arith.mulf %121, %120 : vector<1x128xf32>
    %c0_49 = arith.constant 0 : index
    %c1_50 = arith.constant 1 : index
    %123 = memref.load %arg3[%c0_49, %c1_50] : memref<2x4xf32, #tpu.memory_space<smem>>
    %124 = vector.extract_strided_slice %3 {offsets = [1, 0], sizes = [1, 128], strides = [1, 1]} : vector<4x128xf32> to vector<1x128xf32>
    %125 = vector.broadcast %123 : f32 to vector<1x128xf32>
    %126 = arith.mulf %125, %124 : vector<1x128xf32>
    %127 = arith.addf %122, %126 : vector<1x128xf32>
    %c0_51 = arith.constant 0 : index
    %c2_52 = arith.constant 2 : index
    %128 = memref.load %arg3[%c0_51, %c2_52] : memref<2x4xf32, #tpu.memory_space<smem>>
    %129 = vector.extract_strided_slice %3 {offsets = [2, 0], sizes = [1, 128], strides = [1, 1]} : vector<4x128xf32> to vector<1x128xf32>
    %130 = vector.broadcast %128 : f32 to vector<1x128xf32>
    %131 = arith.mulf %130, %129 : vector<1x128xf32>
    %132 = arith.addf %127, %131 : vector<1x128xf32>
    %c0_53 = arith.constant 0 : index
    %c3_54 = arith.constant 3 : index
    %133 = memref.load %arg3[%c0_53, %c3_54] : memref<2x4xf32, #tpu.memory_space<smem>>
    %134 = vector.extract_strided_slice %3 {offsets = [3, 0], sizes = [1, 128], strides = [1, 1]} : vector<4x128xf32> to vector<1x128xf32>
    %135 = vector.broadcast %133 : f32 to vector<1x128xf32>
    %136 = arith.mulf %135, %134 : vector<1x128xf32>
    %137 = arith.addf %132, %136 : vector<1x128xf32>
    %c1_55 = arith.constant 1 : index
    %c0_56 = arith.constant 0 : index
    %138 = memref.load %arg3[%c1_55, %c0_56] : memref<2x4xf32, #tpu.memory_space<smem>>
    %139 = vector.extract_strided_slice %3 {offsets = [0, 0], sizes = [1, 128], strides = [1, 1]} : vector<4x128xf32> to vector<1x128xf32>
    %140 = vector.broadcast %138 : f32 to vector<1x128xf32>
    %141 = arith.mulf %140, %139 : vector<1x128xf32>
    %c1_57 = arith.constant 1 : index
    %c1_58 = arith.constant 1 : index
    %142 = memref.load %arg3[%c1_57, %c1_58] : memref<2x4xf32, #tpu.memory_space<smem>>
    %143 = vector.extract_strided_slice %3 {offsets = [1, 0], sizes = [1, 128], strides = [1, 1]} : vector<4x128xf32> to vector<1x128xf32>
    %144 = vector.broadcast %142 : f32 to vector<1x128xf32>
    %145 = arith.mulf %144, %143 : vector<1x128xf32>
    %146 = arith.addf %141, %145 : vector<1x128xf32>
    %c1_59 = arith.constant 1 : index
    %c2_60 = arith.constant 2 : index
    %147 = memref.load %arg3[%c1_59, %c2_60] : memref<2x4xf32, #tpu.memory_space<smem>>
    %148 = vector.extract_strided_slice %3 {offsets = [2, 0], sizes = [1, 128], strides = [1, 1]} : vector<4x128xf32> to vector<1x128xf32>
    %149 = vector.broadcast %147 : f32 to vector<1x128xf32>
    %150 = arith.mulf %149, %148 : vector<1x128xf32>
    %151 = arith.addf %146, %150 : vector<1x128xf32>
    %c1_61 = arith.constant 1 : index
    %c3_62 = arith.constant 3 : index
    %152 = memref.load %arg3[%c1_61, %c3_62] : memref<2x4xf32, #tpu.memory_space<smem>>
    %153 = vector.extract_strided_slice %3 {offsets = [3, 0], sizes = [1, 128], strides = [1, 1]} : vector<4x128xf32> to vector<1x128xf32>
    %154 = vector.broadcast %152 : f32 to vector<1x128xf32>
    %155 = arith.mulf %154, %153 : vector<1x128xf32>
    %156 = arith.addf %151, %155 : vector<1x128xf32>
    %157 = tpu.concatenate %99, %118, %137, %156 in 0 : vector<1x128xf32>, vector<1x128xf32>, vector<1x128xf32>, vector<1x128xf32> -> vector<4x128xf32>
    %c0_63 = arith.constant 0 : index
    %c0_64 = arith.constant 0 : index
    %158 = memref.load %arg4[%c0_63, %c0_64] : memref<2x4xf32, #tpu.memory_space<smem>>
    %159 = vector.extract_strided_slice %2 {offsets = [0, 0], sizes = [1, 128], strides = [1, 1]} : vector<4x128xf32> to vector<1x128xf32>
    %160 = vector.broadcast %158 : f32 to vector<1x128xf32>
    %161 = arith.mulf %160, %159 : vector<1x128xf32>
    %c0_65 = arith.constant 0 : index
    %c1_66 = arith.constant 1 : index
    %162 = memref.load %arg4[%c0_65, %c1_66] : memref<2x4xf32, #tpu.memory_space<smem>>
    %163 = vector.extract_strided_slice %2 {offsets = [1, 0], sizes = [1, 128], strides = [1, 1]} : vector<4x128xf32> to vector<1x128xf32>
    %164 = vector.broadcast %162 : f32 to vector<1x128xf32>
    %165 = arith.mulf %164, %163 : vector<1x128xf32>
    %166 = arith.addf %161, %165 : vector<1x128xf32>
    %c0_67 = arith.constant 0 : index
    %c2_68 = arith.constant 2 : index
    %167 = memref.load %arg4[%c0_67, %c2_68] : memref<2x4xf32, #tpu.memory_space<smem>>
    %168 = vector.extract_strided_slice %2 {offsets = [2, 0], sizes = [1, 128], strides = [1, 1]} : vector<4x128xf32> to vector<1x128xf32>
    %169 = vector.broadcast %167 : f32 to vector<1x128xf32>
    %170 = arith.mulf %169, %168 : vector<1x128xf32>
    %171 = arith.addf %166, %170 : vector<1x128xf32>
    %c0_69 = arith.constant 0 : index
    %c3_70 = arith.constant 3 : index
    %172 = memref.load %arg4[%c0_69, %c3_70] : memref<2x4xf32, #tpu.memory_space<smem>>
    %173 = vector.extract_strided_slice %2 {offsets = [3, 0], sizes = [1, 128], strides = [1, 1]} : vector<4x128xf32> to vector<1x128xf32>
    %174 = vector.broadcast %172 : f32 to vector<1x128xf32>
    %175 = arith.mulf %174, %173 : vector<1x128xf32>
    %176 = arith.addf %171, %175 : vector<1x128xf32>
    %c1_71 = arith.constant 1 : index
    %c0_72 = arith.constant 0 : index
    %177 = memref.load %arg4[%c1_71, %c0_72] : memref<2x4xf32, #tpu.memory_space<smem>>
    %178 = vector.extract_strided_slice %2 {offsets = [0, 0], sizes = [1, 128], strides = [1, 1]} : vector<4x128xf32> to vector<1x128xf32>
    %179 = vector.broadcast %177 : f32 to vector<1x128xf32>
    %180 = arith.mulf %179, %178 : vector<1x128xf32>
    %c1_73 = arith.constant 1 : index
    %c1_74 = arith.constant 1 : index
    %181 = memref.load %arg4[%c1_73, %c1_74] : memref<2x4xf32, #tpu.memory_space<smem>>
    %182 = vector.extract_strided_slice %2 {offsets = [1, 0], sizes = [1, 128], strides = [1, 1]} : vector<4x128xf32> to vector<1x128xf32>
    %183 = vector.broadcast %181 : f32 to vector<1x128xf32>
    %184 = arith.mulf %183, %182 : vector<1x128xf32>
    %185 = arith.addf %180, %184 : vector<1x128xf32>
    %c1_75 = arith.constant 1 : index
    %c2_76 = arith.constant 2 : index
    %186 = memref.load %arg4[%c1_75, %c2_76] : memref<2x4xf32, #tpu.memory_space<smem>>
    %187 = vector.extract_strided_slice %2 {offsets = [2, 0], sizes = [1, 128], strides = [1, 1]} : vector<4x128xf32> to vector<1x128xf32>
    %188 = vector.broadcast %186 : f32 to vector<1x128xf32>
    %189 = arith.mulf %188, %187 : vector<1x128xf32>
    %190 = arith.addf %185, %189 : vector<1x128xf32>
    %c1_77 = arith.constant 1 : index
    %c3_78 = arith.constant 3 : index
    %191 = memref.load %arg4[%c1_77, %c3_78] : memref<2x4xf32, #tpu.memory_space<smem>>
    %192 = vector.extract_strided_slice %2 {offsets = [3, 0], sizes = [1, 128], strides = [1, 1]} : vector<4x128xf32> to vector<1x128xf32>
    %193 = vector.broadcast %191 : f32 to vector<1x128xf32>
    %194 = arith.mulf %193, %192 : vector<1x128xf32>
    %195 = arith.addf %190, %194 : vector<1x128xf32>
    %c0_79 = arith.constant 0 : index
    %c0_80 = arith.constant 0 : index
    %196 = memref.load %arg4[%c0_79, %c0_80] : memref<2x4xf32, #tpu.memory_space<smem>>
    %197 = vector.extract_strided_slice %3 {offsets = [0, 0], sizes = [1, 128], strides = [1, 1]} : vector<4x128xf32> to vector<1x128xf32>
    %198 = vector.broadcast %196 : f32 to vector<1x128xf32>
    %199 = arith.mulf %198, %197 : vector<1x128xf32>
    %c0_81 = arith.constant 0 : index
    %c1_82 = arith.constant 1 : index
    %200 = memref.load %arg4[%c0_81, %c1_82] : memref<2x4xf32, #tpu.memory_space<smem>>
    %201 = vector.extract_strided_slice %3 {offsets = [1, 0], sizes = [1, 128], strides = [1, 1]} : vector<4x128xf32> to vector<1x128xf32>
    %202 = vector.broadcast %200 : f32 to vector<1x128xf32>
    %203 = arith.mulf %202, %201 : vector<1x128xf32>
    %204 = arith.addf %199, %203 : vector<1x128xf32>
    %c0_83 = arith.constant 0 : index
    %c2_84 = arith.constant 2 : index
    %205 = memref.load %arg4[%c0_83, %c2_84] : memref<2x4xf32, #tpu.memory_space<smem>>
    %206 = vector.extract_strided_slice %3 {offsets = [2, 0], sizes = [1, 128], strides = [1, 1]} : vector<4x128xf32> to vector<1x128xf32>
    %207 = vector.broadcast %205 : f32 to vector<1x128xf32>
    %208 = arith.mulf %207, %206 : vector<1x128xf32>
    %209 = arith.addf %204, %208 : vector<1x128xf32>
    %c0_85 = arith.constant 0 : index
    %c3_86 = arith.constant 3 : index
    %210 = memref.load %arg4[%c0_85, %c3_86] : memref<2x4xf32, #tpu.memory_space<smem>>
    %211 = vector.extract_strided_slice %3 {offsets = [3, 0], sizes = [1, 128], strides = [1, 1]} : vector<4x128xf32> to vector<1x128xf32>
    %212 = vector.broadcast %210 : f32 to vector<1x128xf32>
    %213 = arith.mulf %212, %211 : vector<1x128xf32>
    %214 = arith.addf %209, %213 : vector<1x128xf32>
    %c1_87 = arith.constant 1 : index
    %c0_88 = arith.constant 0 : index
    %215 = memref.load %arg4[%c1_87, %c0_88] : memref<2x4xf32, #tpu.memory_space<smem>>
    %216 = vector.extract_strided_slice %3 {offsets = [0, 0], sizes = [1, 128], strides = [1, 1]} : vector<4x128xf32> to vector<1x128xf32>
    %217 = vector.broadcast %215 : f32 to vector<1x128xf32>
    %218 = arith.mulf %217, %216 : vector<1x128xf32>
    %c1_89 = arith.constant 1 : index
    %c1_90 = arith.constant 1 : index
    %219 = memref.load %arg4[%c1_89, %c1_90] : memref<2x4xf32, #tpu.memory_space<smem>>
    %220 = vector.extract_strided_slice %3 {offsets = [1, 0], sizes = [1, 128], strides = [1, 1]} : vector<4x128xf32> to vector<1x128xf32>
    %221 = vector.broadcast %219 : f32 to vector<1x128xf32>
    %222 = arith.mulf %221, %220 : vector<1x128xf32>
    %223 = arith.addf %218, %222 : vector<1x128xf32>
    %c1_91 = arith.constant 1 : index
    %c2_92 = arith.constant 2 : index
    %224 = memref.load %arg4[%c1_91, %c2_92] : memref<2x4xf32, #tpu.memory_space<smem>>
    %225 = vector.extract_strided_slice %3 {offsets = [2, 0], sizes = [1, 128], strides = [1, 1]} : vector<4x128xf32> to vector<1x128xf32>
    %226 = vector.broadcast %224 : f32 to vector<1x128xf32>
    %227 = arith.mulf %226, %225 : vector<1x128xf32>
    %228 = arith.addf %223, %227 : vector<1x128xf32>
    %c1_93 = arith.constant 1 : index
    %c3_94 = arith.constant 3 : index
    %229 = memref.load %arg4[%c1_93, %c3_94] : memref<2x4xf32, #tpu.memory_space<smem>>
    %230 = vector.extract_strided_slice %3 {offsets = [3, 0], sizes = [1, 128], strides = [1, 1]} : vector<4x128xf32> to vector<1x128xf32>
    %231 = vector.broadcast %229 : f32 to vector<1x128xf32>
    %232 = arith.mulf %231, %230 : vector<1x128xf32>
    %233 = arith.addf %228, %232 : vector<1x128xf32>
    %234 = tpu.concatenate %176, %195, %214, %233 in 0 : vector<1x128xf32>, vector<1x128xf32>, vector<1x128xf32>, vector<1x128xf32> -> vector<4x128xf32>
    %cst = arith.constant dense<0.000000e+00> : vector<128x128xf32>
    %235 = tpu.matmul %157, %80, %cst {dimension_numbers = #tpu.dot_dimension_numbers<[0], [0], [1], [1], [0, 1, 1, 1], [], []>} : vector<4x128xf32>, vector<4x128xf32>, vector<128x128xf32> -> vector<128x128xf32>
    %cst_95 = arith.constant dense<0xFF800000> : vector<128xf32>
    %236 = vector.multi_reduction <maximumf>, %235, %cst_95 [0] : vector<128x128xf32> to vector<128xf32>
    %237 = vector.shape_cast %236 : vector<128xf32> to vector<1x128xf32>
    %238 = vector.broadcast %237 : vector<1x128xf32> to vector<128x128xf32>
    %239 = arith.subf %235, %238 : vector<128x128xf32>
    %240 = math.exp %239 : vector<128x128xf32>
    %cst_96 = arith.constant dense<0.000000e+00> : vector<128xf32>
    %241 = vector.multi_reduction <add>, %240, %cst_96 [0] : vector<128x128xf32> to vector<128xf32>
    %242 = vector.shape_cast %241 : vector<128xf32> to vector<1x128xf32>
    %243 = vector.broadcast %242 : vector<1x128xf32> to vector<128x128xf32>
    %244 = arith.divf %240, %243 : vector<128x128xf32>
    %cst_97 = arith.constant dense<0.000000e+00> : vector<4x128xf32>
    %245 = tpu.matmul %234, %244, %cst_97 {dimension_numbers = #tpu.dot_dimension_numbers<[1], [1], [0], [0], [0, 0, 1, 0], [], []>} : vector<4x128xf32>, vector<128x128xf32>, vector<4x128xf32> -> vector<4x128xf32>
    %246 = vector.extract_strided_slice %245 {offsets = [0, 0], sizes = [2, 128], strides = [1, 1]} : vector<4x128xf32> to vector<2x128xf32>
    %c0_98 = arith.constant 0 : index
    %c0_99 = arith.constant 0 : index
    %247 = memref.load %arg5[%c0_98, %c0_99] : memref<4x2xf32, #tpu.memory_space<smem>>
    %248 = vector.extract_strided_slice %246 {offsets = [0, 0], sizes = [1, 128], strides = [1, 1]} : vector<2x128xf32> to vector<1x128xf32>
    %249 = vector.broadcast %247 : f32 to vector<1x128xf32>
    %250 = arith.mulf %249, %248 : vector<1x128xf32>
    %c0_100 = arith.constant 0 : index
    %c1_101 = arith.constant 1 : index
    %251 = memref.load %arg5[%c0_100, %c1_101] : memref<4x2xf32, #tpu.memory_space<smem>>
    %252 = vector.extract_strided_slice %246 {offsets = [1, 0], sizes = [1, 128], strides = [1, 1]} : vector<2x128xf32> to vector<1x128xf32>
    %253 = vector.broadcast %251 : f32 to vector<1x128xf32>
    %254 = arith.mulf %253, %252 : vector<1x128xf32>
    %255 = arith.addf %250, %254 : vector<1x128xf32>
    %c1_102 = arith.constant 1 : index
    %c0_103 = arith.constant 0 : index
    %256 = memref.load %arg5[%c1_102, %c0_103] : memref<4x2xf32, #tpu.memory_space<smem>>
    %257 = vector.extract_strided_slice %246 {offsets = [0, 0], sizes = [1, 128], strides = [1, 1]} : vector<2x128xf32> to vector<1x128xf32>
    %258 = vector.broadcast %256 : f32 to vector<1x128xf32>
    %259 = arith.mulf %258, %257 : vector<1x128xf32>
    %c1_104 = arith.constant 1 : index
    %c1_105 = arith.constant 1 : index
    %260 = memref.load %arg5[%c1_104, %c1_105] : memref<4x2xf32, #tpu.memory_space<smem>>
    %261 = vector.extract_strided_slice %246 {offsets = [1, 0], sizes = [1, 128], strides = [1, 1]} : vector<2x128xf32> to vector<1x128xf32>
    %262 = vector.broadcast %260 : f32 to vector<1x128xf32>
    %263 = arith.mulf %262, %261 : vector<1x128xf32>
    %264 = arith.addf %259, %263 : vector<1x128xf32>
    %c2_106 = arith.constant 2 : index
    %c0_107 = arith.constant 0 : index
    %265 = memref.load %arg5[%c2_106, %c0_107] : memref<4x2xf32, #tpu.memory_space<smem>>
    %266 = vector.extract_strided_slice %246 {offsets = [0, 0], sizes = [1, 128], strides = [1, 1]} : vector<2x128xf32> to vector<1x128xf32>
    %267 = vector.broadcast %265 : f32 to vector<1x128xf32>
    %268 = arith.mulf %267, %266 : vector<1x128xf32>
    %c2_108 = arith.constant 2 : index
    %c1_109 = arith.constant 1 : index
    %269 = memref.load %arg5[%c2_108, %c1_109] : memref<4x2xf32, #tpu.memory_space<smem>>
    %270 = vector.extract_strided_slice %246 {offsets = [1, 0], sizes = [1, 128], strides = [1, 1]} : vector<2x128xf32> to vector<1x128xf32>
    %271 = vector.broadcast %269 : f32 to vector<1x128xf32>
    %272 = arith.mulf %271, %270 : vector<1x128xf32>
    %273 = arith.addf %268, %272 : vector<1x128xf32>
    %c3_110 = arith.constant 3 : index
    %c0_111 = arith.constant 0 : index
    %274 = memref.load %arg5[%c3_110, %c0_111] : memref<4x2xf32, #tpu.memory_space<smem>>
    %275 = vector.extract_strided_slice %246 {offsets = [0, 0], sizes = [1, 128], strides = [1, 1]} : vector<2x128xf32> to vector<1x128xf32>
    %276 = vector.broadcast %274 : f32 to vector<1x128xf32>
    %277 = arith.mulf %276, %275 : vector<1x128xf32>
    %c3_112 = arith.constant 3 : index
    %c1_113 = arith.constant 1 : index
    %278 = memref.load %arg5[%c3_112, %c1_113] : memref<4x2xf32, #tpu.memory_space<smem>>
    %279 = vector.extract_strided_slice %246 {offsets = [1, 0], sizes = [1, 128], strides = [1, 1]} : vector<2x128xf32> to vector<1x128xf32>
    %280 = vector.broadcast %278 : f32 to vector<1x128xf32>
    %281 = arith.mulf %280, %279 : vector<1x128xf32>
    %282 = arith.addf %277, %281 : vector<1x128xf32>
    %283 = tpu.concatenate %255, %264, %273, %282 in 0 : vector<1x128xf32>, vector<1x128xf32>, vector<1x128xf32>, vector<1x128xf32> -> vector<4x128xf32>
    %284 = vector.extract_strided_slice %245 {offsets = [2, 0], sizes = [2, 128], strides = [1, 1]} : vector<4x128xf32> to vector<2x128xf32>
    %c0_114 = arith.constant 0 : index
    %c0_115 = arith.constant 0 : index
    %285 = memref.load %arg5[%c0_114, %c0_115] : memref<4x2xf32, #tpu.memory_space<smem>>
    %286 = vector.extract_strided_slice %284 {offsets = [0, 0], sizes = [1, 128], strides = [1, 1]} : vector<2x128xf32> to vector<1x128xf32>
    %287 = vector.broadcast %285 : f32 to vector<1x128xf32>
    %288 = arith.mulf %287, %286 : vector<1x128xf32>
    %c0_116 = arith.constant 0 : index
    %c1_117 = arith.constant 1 : index
    %289 = memref.load %arg5[%c0_116, %c1_117] : memref<4x2xf32, #tpu.memory_space<smem>>
    %290 = vector.extract_strided_slice %284 {offsets = [1, 0], sizes = [1, 128], strides = [1, 1]} : vector<2x128xf32> to vector<1x128xf32>
    %291 = vector.broadcast %289 : f32 to vector<1x128xf32>
    %292 = arith.mulf %291, %290 : vector<1x128xf32>
    %293 = arith.addf %288, %292 : vector<1x128xf32>
    %c1_118 = arith.constant 1 : index
    %c0_119 = arith.constant 0 : index
    %294 = memref.load %arg5[%c1_118, %c0_119] : memref<4x2xf32, #tpu.memory_space<smem>>
    %295 = vector.extract_strided_slice %284 {offsets = [0, 0], sizes = [1, 128], strides = [1, 1]} : vector<2x128xf32> to vector<1x128xf32>
    %296 = vector.broadcast %294 : f32 to vector<1x128xf32>
    %297 = arith.mulf %296, %295 : vector<1x128xf32>
    %c1_120 = arith.constant 1 : index
    %c1_121 = arith.constant 1 : index
    %298 = memref.load %arg5[%c1_120, %c1_121] : memref<4x2xf32, #tpu.memory_space<smem>>
    %299 = vector.extract_strided_slice %284 {offsets = [1, 0], sizes = [1, 128], strides = [1, 1]} : vector<2x128xf32> to vector<1x128xf32>
    %300 = vector.broadcast %298 : f32 to vector<1x128xf32>
    %301 = arith.mulf %300, %299 : vector<1x128xf32>
    %302 = arith.addf %297, %301 : vector<1x128xf32>
    %c2_122 = arith.constant 2 : index
    %c0_123 = arith.constant 0 : index
    %303 = memref.load %arg5[%c2_122, %c0_123] : memref<4x2xf32, #tpu.memory_space<smem>>
    %304 = vector.extract_strided_slice %284 {offsets = [0, 0], sizes = [1, 128], strides = [1, 1]} : vector<2x128xf32> to vector<1x128xf32>
    %305 = vector.broadcast %303 : f32 to vector<1x128xf32>
    %306 = arith.mulf %305, %304 : vector<1x128xf32>
    %c2_124 = arith.constant 2 : index
    %c1_125 = arith.constant 1 : index
    %307 = memref.load %arg5[%c2_124, %c1_125] : memref<4x2xf32, #tpu.memory_space<smem>>
    %308 = vector.extract_strided_slice %284 {offsets = [1, 0], sizes = [1, 128], strides = [1, 1]} : vector<2x128xf32> to vector<1x128xf32>
    %309 = vector.broadcast %307 : f32 to vector<1x128xf32>
    %310 = arith.mulf %309, %308 : vector<1x128xf32>
    %311 = arith.addf %306, %310 : vector<1x128xf32>
    %c3_126 = arith.constant 3 : index
    %c0_127 = arith.constant 0 : index
    %312 = memref.load %arg5[%c3_126, %c0_127] : memref<4x2xf32, #tpu.memory_space<smem>>
    %313 = vector.extract_strided_slice %284 {offsets = [0, 0], sizes = [1, 128], strides = [1, 1]} : vector<2x128xf32> to vector<1x128xf32>
    %314 = vector.broadcast %312 : f32 to vector<1x128xf32>
    %315 = arith.mulf %314, %313 : vector<1x128xf32>
    %c3_128 = arith.constant 3 : index
    %c1_129 = arith.constant 1 : index
    %316 = memref.load %arg5[%c3_128, %c1_129] : memref<4x2xf32, #tpu.memory_space<smem>>
    %317 = vector.extract_strided_slice %284 {offsets = [1, 0], sizes = [1, 128], strides = [1, 1]} : vector<2x128xf32> to vector<1x128xf32>
    %318 = vector.broadcast %316 : f32 to vector<1x128xf32>
    %319 = arith.mulf %318, %317 : vector<1x128xf32>
    %320 = arith.addf %315, %319 : vector<1x128xf32>
    %321 = tpu.concatenate %293, %302, %311, %320 in 0 : vector<1x128xf32>, vector<1x128xf32>, vector<1x128xf32>, vector<1x128xf32> -> vector<4x128xf32>
    %322 = arith.addf %2, %283 : vector<4x128xf32>
    %c0_130 = arith.constant 0 : index
    %c0_131 = arith.constant 0 : index
    %c0_132 = arith.constant 0 : index
    %323 = vector.load %arg6[%c0_130, %c0_131, %c0_132] : memref<1x4x256xf32, #tpu.memory_space<vmem>>, vector<1x4x128xf32>
    %324 = vector.shape_cast %323 : vector<1x4x128xf32> to vector<4x128xf32>
    %325 = vector.shape_cast %322 : vector<4x128xf32> to vector<1x4x128xf32>
    tpu.vector_store %arg6[%c0_130, %c0_131, %c0_132], %325 {strides = array<i32>} : memref<1x4x256xf32, #tpu.memory_space<vmem>>, vector<1x4x128xf32>,
    %326 = arith.addf %3, %321 : vector<4x128xf32>
    %c0_133 = arith.constant 0 : index
    %c0_134 = arith.constant 0 : index
    %c128 = arith.constant 128 : index
    %327 = vector.load %arg6[%c0_133, %c0_134, %c128] : memref<1x4x256xf32, #tpu.memory_space<vmem>>, vector<1x4x128xf32>
    %328 = vector.shape_cast %327 : vector<1x4x128xf32> to vector<4x128xf32>
    %329 = vector.shape_cast %326 : vector<4x128xf32> to vector<1x4x128xf32>
    tpu.vector_store %arg6[%c0_133, %c0_134, %c128], %329 {strides = array<i32>} : memref<1x4x256xf32, #tpu.memory_space<vmem>>, vector<1x4x128xf32>,
    return
  }
  func.func @transform_0(%arg0: i32) -> (i32, i32, i32) {
    %c0_i32 = arith.constant 0 : i32
    %c0_i32_0 = arith.constant 0 : i32
    %c0_i32_1 = arith.constant 0 : i32
    return %arg0, %c0_i32, %c0_i32_0 : i32, i32, i32
  }
  func.func @transform_1(%arg0: i32) -> (i32, i32) {
    %c0_i32 = arith.constant 0 : i32
    %c0_i32_0 = arith.constant 0 : i32
    %c0_i32_1 = arith.constant 0 : i32
    return %c0_i32, %c0_i32_0 : i32, i32
  }
  func.func @transform_2(%arg0: i32) -> (i32, i32) {
    %c0_i32 = arith.constant 0 : i32
    %c0_i32_0 = arith.constant 0 : i32
    %c0_i32_1 = arith.constant 0 : i32
    return %c0_i32, %c0_i32_0 : i32, i32
  }
  func.func @transform_3(%arg0: i32) -> (i32, i32) {
    %c0_i32 = arith.constant 0 : i32
    %c0_i32_0 = arith.constant 0 : i32
    %c0_i32_1 = arith.constant 0 : i32
    return %c0_i32, %c0_i32_0 : i32, i32
  }
  func.func @transform_4(%arg0: i32) -> (i32, i32) {
    %c0_i32 = arith.constant 0 : i32
    %c0_i32_0 = arith.constant 0 : i32
    %c0_i32_1 = arith.constant 0 : i32
    return %c0_i32, %c0_i32_0 : i32, i32
  }
  func.func @transform_5(%arg0: i32) -> (i32, i32, i32) {
    %c0_i32 = arith.constant 0 : i32
    %c0_i32_0 = arith.constant 0 : i32
    %c0_i32_1 = arith.constant 0 : i32
    return %arg0, %c0_i32, %c0_i32_0 : i32, i32, i32
  }
}

</mosaic_0001>

<llo_original>
// kernel: tpu_custom_call.1
$region0: #{tpu_custom_call.1}
  #allocation0 [shape = 'u32[]', space=smem, size = 0x4, offset = 0x4, fixed_abs, tag = 'smem constant byte address 0x4 - core index']
  #allocation1 [shape = 'u32[144,128]{1,0:T(1,128)}', space=vmem, size = 0x12000, scoped, tag = 'internal scratch']
  %s0 = inlined_call_operand.hbm [shape: f32[2,4,256], index: 0, kind: input, shape index: {}, may-alias: {0,5}]
  %s1 = inlined_call_operand.vmem [shape: f32[2,4], index: 1, kind: input, shape index: {}]
  %s2 = inlined_call_operand.vmem [shape: f32[2,4], index: 2, kind: input, shape index: {}]
  %s3 = inlined_call_operand.vmem [shape: f32[2,4], index: 3, kind: input, shape index: {}]
  %s4 = inlined_call_operand.vmem [shape: f32[4,2], index: 4, kind: input, shape index: {}]
  %s5 = inlined_call_operand.hbm [shape: f32[2,4,256], index: 5, kind: output, shape index: {}, may-alias: {0,5}]
  %s6 = sld [smem:[#allocation0]]
  $region73: #{tpu_custom_call.1} parent=0
    _
  %s8 = ssub.s32 1, %s6
  %s9 = scalar_select 0, %s8, %s6
  $region1: #{tpu_custom_call.1} parent=0
    #allocation2 [shape = 'u8[8192]{0}', space=vmem, size = 0x2000, scoped, tag = 'input window, operand 0']
    #allocation3 [shape = 's32[2]{0}', space=sflag, size = 0x8, scoped, tag = 'scoped memory for tpu_custom_call.1']
    #allocation4 [shape = 's32[2]{0}', space=sflag, size = 0x8, scoped, tag = 'scoped memory for tpu_custom_call.1']
    #allocation5 [shape = 's32[2]{0}', space=sflag, size = 0x8, scoped, tag = 'scoped memory for tpu_custom_call.1']
    #allocation6 [shape = 'u8[1024]{0}', space=smem, size = 0x400, scoped, tag = 'input window, operand 1, single buffered']
    #allocation7 [shape = 'u8[1024]{0}', space=smem, size = 0x400, scoped, tag = 'input window, operand 2, single buffered']
    #allocation8 [shape = 's32[1]{0}', space=sflag, size = 0x4, scoped, tag = 'scoped memory for tpu_custom_call.1']
    #allocation9 [shape = 'u8[1024]{0}', space=smem, size = 0x400, scoped, tag = 'input window, operand 3, single buffered']
    #allocation10 [shape = 'u8[2048]{0}', space=smem, size = 0x800, scoped, tag = 'input window, operand 4, single buffered']
    #allocation11 [shape = 's32[1]{0}', space=sflag, size = 0x4, scoped, tag = 'scoped memory for tpu_custom_call.1']
    #allocation12 [shape = 'u8[8192]{0}', space=vmem, size = 0x2000, scoped, tag = 'output window, operand 0']
    %10 = vsyncpa [#allocation3], 0
    %s11 = scalar_lea.sflag [#allocation3], 1
    %12 = vsyncpa %s11, 0
    %13 = vsyncpa [#allocation5], 0
    %14 = vsyncpa [#allocation8], 0
    %15 = vsyncpa [#allocation11], 0
    %16 = vsyncpa [#allocation4], 0
    %s17 = scalar_lea.sflag [#allocation4], 1
    %18 = vsyncpa %s17, 0
    loop: start=0, step=1, limit=4
    $region2: #{tpu_custom_call.1} parent=1 // loop_pre_header
      _
    $region3: #{tpu_custom_call.1} parent=1 // loop_header
      %s20 = sphi 0, %s24
      %p21 = scmp.ge.s32.totalorder %s20, 4
      %s30 = sphi 0, %s32
      %s33 = sphi 0, %s30
      %s34 = sphi 0, %s33
      %s50 = sphi 0, %s34
      %s54 = sphi 0, %s54
      %s56 = sphi 0, %s54
      %s57 = sphi 0, %s56
      %s71 = sphi 0, %s57
      %s75 = sphi 0, %s75
      %s77 = sphi 0, %s75
      %s78 = sphi 0, %s77
      %s92 = sphi 0, %s78
      %s96 = sphi 0, %s96
      %s98 = sphi 0, %s96
      %s99 = sphi 0, %s98
      %s113 = sphi 0, %s99
      %s117 = sphi 0, %s117
      %s119 = sphi 0, %s117
      %s120 = sphi 0, %s119
      %s134 = sphi 0, %s120
      %s140 = sphi 0, %s142
      %s143 = sphi 0, %s140
      %s144 = sphi 0, %s143
      %s160 = sphi 0, %s144
    $region4: #{tpu_custom_call.1} parent=1 // loop_header_branch
      %23 = sbr.rel (%p21) target = $region8
    $region5: #{tpu_custom_call.1} parent=1 // loop_body
      %s25 = ssub.s32 %s20, 1
      %s26 = ssub.s32 %s20, 2
      %s27 = sadd.s32 %s20, 1
      %s28 = ssub.s32 %s20, %s27
      %p29 = scmp.eq.s32.totalorder %s28, 0
      %s31 = sadd.s32 %s30, 1
      %s32 = scalar_select %p29, %s30, %s31
      %p35 = pneg %p29
      %p36 = scmp.eq.s32.totalorder %s20, 1
      %p37 = por %p35, %p36
      %p38 = scmp.ne.s32.totalorder %s30, %s33
      %p39 = scmp.eq.s32.totalorder %s20, 0
      %p40 = por %p38, %p39
      %p41 = scmp.ne.s32.totalorder %s30, %s33
      %p42 = scmp.eq.s32.totalorder %s25, 1
      %p43 = por %p41, %p42
      %p44 = scmp.ne.s32.totalorder %s33, %s34
      %p45 = scmp.eq.s32.totalorder %s25, 0
      %p46 = por %p44, %p45
      %p47 = scmp.ne.s32.totalorder %s33, %s34
      %p48 = scmp.eq.s32.totalorder %s26, 1
      %p49 = por %p47, %p48
      %p51 = scmp.ne.s32.totalorder %s34, %s50
      %p52 = scmp.eq.s32.totalorder %s26, 0
      %p53 = por %p51, %p52
      %s55 = sadd.s32 %s54, 1
      %p58 = scmp.eq.s32.totalorder %s20, 1
      %p59 = scmp.ne.s32.totalorder %s54, %s56
      %p60 = scmp.eq.s32.totalorder %s20, 0
      %p61 = por %p59, %p60
      %p62 = scmp.ne.s32.totalorder %s54, %s56
      %p63 = scmp.eq.s32.totalorder %s25, 1
      %p64 = por %p62, %p63
      %p65 = scmp.ne.s32.totalorder %s56, %s57
      %p66 = scmp.eq.s32.totalorder %s25, 0
      %p67 = por %p65, %p66
      %p68 = scmp.ne.s32.totalorder %s56, %s57
      %p69 = scmp.eq.s32.totalorder %s26, 1
      %p70 = por %p68, %p69
      %p72 = scmp.ne.s32.totalorder %s57, %s71
      %p73 = scmp.eq.s32.totalorder %s26, 0
      %p74 = por %p72, %p73
      %s76 = sadd.s32 %s75, 1
      %p79 = scmp.eq.s32.totalorder %s20, 1
      %p80 = scmp.ne.s32.totalorder %s75, %s77
      %p81 = scmp.eq.s32.totalorder %s20, 0
      %p82 = por %p80, %p81
      %p83 = scmp.ne.s32.totalorder %s75, %s77
      %p84 = scmp.eq.s32.totalorder %s25, 1
      %p85 = por %p83, %p84
      %p86 = scmp.ne.s32.totalorder %s77, %s78
      %p87 = scmp.eq.s32.totalorder %s25, 0
      %p88 = por %p86, %p87
      %p89 = scmp.ne.s32.totalorder %s77, %s78
      %p90 = scmp.eq.s32.totalorder %s26, 1
      %p91 = por %p89, %p90
      %p93 = scmp.ne.s32.totalorder %s78, %s92
      %p94 = scmp.eq.s32.totalorder %s26, 0
      %p95 = por %p93, %p94
      %s97 = sadd.s32 %s96, 1
      %p100 = scmp.eq.s32.totalorder %s20, 1
      %p101 = scmp.ne.s32.totalorder %s96, %s98
      %p102 = scmp.eq.s32.totalorder %s20, 0
      %p103 = por %p101, %p102
      %p104 = scmp.ne.s32.totalorder %s96, %s98
      %p105 = scmp.eq.s32.totalorder %s25, 1
      %p106 = por %p104, %p105
      %p107 = scmp.ne.s32.totalorder %s98, %s99
      %p108 = scmp.eq.s32.totalorder %s25, 0
      %p109 = por %p107, %p108
      %p110 = scmp.ne.s32.totalorder %s98, %s99
      %p111 = scmp.eq.s32.totalorder %s26, 1
      %p112 = por %p110, %p111
      %p114 = scmp.ne.s32.totalorder %s99, %s113
      %p115 = scmp.eq.s32.totalorder %s26, 0
      %p116 = por %p114, %p115
      %s118 = sadd.s32 %s117, 1
      %p121 = scmp.eq.s32.totalorder %s20, 1
      %p122 = scmp.ne.s32.totalorder %s117, %s119
      %p123 = scmp.eq.s32.totalorder %s20, 0
      %p124 = por %p122, %p123
      %p125 = scmp.ne.s32.totalorder %s117, %s119
      %p126 = scmp.eq.s32.totalorder %s25, 1
      %p127 = por %p125, %p126
      %p128 = scmp.ne.s32.totalorder %s119, %s120
      %p129 = scmp.eq.s32.totalorder %s25, 0
      %p130 = por %p128, %p129
      %p131 = scmp.ne.s32.totalorder %s119, %s120
      %p132 = scmp.eq.s32.totalorder %s26, 1
      %p133 = por %p131, %p132
      %p135 = scmp.ne.s32.totalorder %s120, %s134
      %p136 = scmp.eq.s32.totalorder %s26, 0
      %p137 = por %p135, %p136
      %s138 = ssub.s32 %s20, %s27
      %p139 = scmp.eq.s32.totalorder %s138, 0
      %s141 = sadd.s32 %s140, 1
      %s142 = scalar_select %p139, %s140, %s141
      %p145 = pneg %p139
      %p146 = scmp.eq.s32.totalorder %s20, 1
      %p147 = por %p145, %p146
      %p148 = scmp.ne.s32.totalorder %s140, %s143
      %p149 = scmp.eq.s32.totalorder %s20, 0
      %p150 = por %p148, %p149
      %p151 = scmp.ne.s32.totalorder %s140, %s143
      %p152 = scmp.eq.s32.totalorder %s25, 1
      %p153 = por %p151, %p152
      %p154 = scmp.ne.s32.totalorder %s143, %s144
      %p155 = scmp.eq.s32.totalorder %s25, 0
      %p156 = por %p154, %p155
      %p157 = scmp.ne.s32.totalorder %s143, %s144
      %p158 = scmp.eq.s32.totalorder %s26, 1
      %p159 = por %p157, %p158
      %p161 = scmp.ne.s32.totalorder %s144, %s160
      %p162 = scmp.eq.s32.totalorder %s26, 0
      %p163 = por %p161, %p162
      %p164 = scmp.le.s32.totalorder 1, %s20
      %p165 = scmp.lt.s32.totalorder %s20, 3
      %p166 = pnand %p164, %p165
      %p167 = pneg %p166
      // Predicated region
      $region9: #{tpu_custom_call.1} parent=5 // pred_check
        _
      $region10: #{tpu_custom_call.1} parent=5 // pred_check_branch
        %169 = sbr.rel (%p166) target = $region12
      $region11: #{tpu_custom_call.1} parent=5 // pred_region
        %s170 = ssub.s32 %s20, 1
        // Predicated region
        $region13: #{tpu_custom_call.1} parent=11 // pred_check
          %p171 = pneg %p67
        $region14: #{tpu_custom_call.1} parent=11 // pred_check_branch
          %173 = sbr.rel (%p171) target = $region16
        $region15: #{tpu_custom_call.1} parent=11 // pred_region
          %s175 = ssub.s32 32, 32
          %176 = vsyncadd [#allocation5], %s175
          %s178 = sshll.u32 %s1, 4
          %s179 = int_to_ptr.vmem [resolvable:$true] %s178
          %181 = dma.vmem_to_smem %s179, 32, [#allocation6], [#allocation5]
        $region16: #{tpu_custom_call.1} parent=11 // pred_fallthru
          _
        // Predicated region
        $region17: #{tpu_custom_call.1} parent=11 // pred_check
          %p182 = pneg %p88
        $region18: #{tpu_custom_call.1} parent=11 // pred_check_branch
          %184 = sbr.rel (%p182) target = $region20
        $region19: #{tpu_custom_call.1} parent=11 // pred_region
          %s186 = ssub.s32 32, 32
          %187 = vsyncadd [#allocation8], %s186
          %s189 = sshll.u32 %s2, 4
          %s190 = int_to_ptr.vmem [resolvable:$true] %s189
          %192 = dma.vmem_to_smem %s190, 32, [#allocation7], [#allocation8]
        $region20: #{tpu_custom_call.1} parent=11 // pred_fallthru
          _
        // Predicated region
        $region21: #{tpu_custom_call.1} parent=11 // pred_check
          %p193 = pneg %p109
        $region22: #{tpu_custom_call.1} parent=11 // pred_check_branch
          %195 = sbr.rel (%p193) target = $region24
        $region23: #{tpu_custom_call.1} parent=11 // pred_region
          %s197 = ssub.s32 32, 32
          %198 = vsyncadd [#allocation8], %s197
          %s200 = sshll.u32 %s3, 4
          %s201 = int_to_ptr.vmem [resolvable:$true] %s200
          %203 = dma.vmem_to_smem %s201, 32, [#allocation9], [#allocation8]
        $region24: #{tpu_custom_call.1} parent=11 // pred_fallthru
          _
        // Predicated region
        $region25: #{tpu_custom_call.1} parent=11 // pred_check
          %p204 = pneg %p130
        $region26: #{tpu_custom_call.1} parent=11 // pred_check_branch
          %206 = sbr.rel (%p204) target = $region28
        $region27: #{tpu_custom_call.1} parent=11 // pred_region
          %s208 = ssub.s32 64, 64
          %209 = vsyncadd [#allocation11], %s208
          %s211 = sshll.u32 %s4, 4
          %s212 = int_to_ptr.vmem [resolvable:$true] %s211
          %214 = dma.vmem_to_smem %s212, 64, [#allocation10], [#allocation11]
        $region28: #{tpu_custom_call.1} parent=11 // pred_fallthru
          _
      $region12: #{tpu_custom_call.1} parent=5 // pred_fallthru
        _
      %p215 = scmp.lt.s32.totalorder %s20, 2
      // Predicated region
      $region29: #{tpu_custom_call.1} parent=5 // pred_check
        %p216 = pneg %p215
      $region30: #{tpu_custom_call.1} parent=5 // pred_check_branch
        %218 = sbr.rel (%p216) target = $region32
      $region31: #{tpu_custom_call.1} parent=5 // pred_region
        // Predicated region
        $region33: #{tpu_custom_call.1} parent=31 // pred_check
          %p219 = pneg %p40
        $region34: #{tpu_custom_call.1} parent=31 // pred_check_branch
          %221 = sbr.rel (%p219) target = $region36
        $region35: #{tpu_custom_call.1} parent=31 // pred_region
          %s222 = sand.u32 %s30, 1
          %s223 = scalar_lea.sflag [#allocation3], %s222
          %s224 = sand.u32 %s30, 1
          %s225 = smul.addr %s224, 8
          %s226 = scalar_lea.vmem [#allocation2], %s225
          %s228 = ssub.s32 128, 128
          %229 = vsyncadd %s223, %s228
          %s230 = smul.addr %s20, 2
          %s231 = smul.addr %s230, 64
          %s232 = scalar_lea.hbm %s0, %s231
          %s234 = sshll.u32 %s226, 4
          %s235 = int_to_ptr.vmem [resolvable:$true] %s234
          %237 = dma.hbm_to_vmem [thread:$0]  %s232, 128, %s235, %s223
        $region36: #{tpu_custom_call.1} parent=31 // pred_fallthru
          _
      $region32: #{tpu_custom_call.1} parent=5 // pred_fallthru
        _
      %p238 = scmp.le.s32.totalorder 1, %s20
      %p239 = scmp.lt.s32.totalorder %s20, 3
      %p240 = pnand %p238, %p239
      %p241 = pneg %p240
      // Predicated region
      $region37: #{tpu_custom_call.1} parent=5 // pred_check
        _
      $region38: #{tpu_custom_call.1} parent=5 // pred_check_branch
        %243 = sbr.rel (%p240) target = $region40
      $region39: #{tpu_custom_call.1} parent=5 // pred_region
        %s244 = ssub.s32 %s20, 1
        %s245 = sand.u32 %s33, 1
        %s246 = scalar_lea.sflag [#allocation3], %s245
        %s247 = sand.u32 %s33, 1
        %s248 = smul.addr %s247, 8
        %s249 = scalar_lea.vmem [#allocation2], %s248
        // Predicated region
        $region41: #{tpu_custom_call.1} parent=39 // pred_check
          %p250 = pneg %p46
        $region42: #{tpu_custom_call.1} parent=39 // pred_check_branch
          %252 = sbr.rel (%p250) target = $region44
        $region43: #{tpu_custom_call.1} parent=39 // pred_region
          %253 = dma.done %s246, 128
        $region44: #{tpu_custom_call.1} parent=39 // pred_fallthru
          _
        // Predicated region
        $region45: #{tpu_custom_call.1} parent=39 // pred_check
          %p254 = pneg %p67
        $region46: #{tpu_custom_call.1} parent=39 // pred_check_branch
          %256 = sbr.rel (%p254) target = $region48
        $region47: #{tpu_custom_call.1} parent=39 // pred_region
          %257 = dma.done [#allocation5], 32
        $region48: #{tpu_custom_call.1} parent=39 // pred_fallthru
          _
        // Predicated region
        $region49: #{tpu_custom_call.1} parent=39 // pred_check
          %p258 = pneg %p88
        $region50: #{tpu_custom_call.1} parent=39 // pred_check_branch
          %260 = sbr.rel (%p258) target = $region52
        $region51: #{tpu_custom_call.1} parent=39 // pred_region
          %261 = dma.done [#allocation8], 32
        $region52: #{tpu_custom_call.1} parent=39 // pred_fallthru
          _
        // Predicated region
        $region53: #{tpu_custom_call.1} parent=39 // pred_check
          %p262 = pneg %p109
        $region54: #{tpu_custom_call.1} parent=39 // pred_check_branch
          %264 = sbr.rel (%p262) target = $region56
        $region55: #{tpu_custom_call.1} parent=39 // pred_region
          %265 = dma.done [#allocation8], 32
        $region56: #{tpu_custom_call.1} parent=39 // pred_fallthru
          _
        // Predicated region
        $region57: #{tpu_custom_call.1} parent=39 // pred_check
          %p266 = pneg %p130
        $region58: #{tpu_custom_call.1} parent=39 // pred_check_branch
          %268 = sbr.rel (%p266) target = $region60
        $region59: #{tpu_custom_call.1} parent=39 // pred_region
          %269 = dma.done [#allocation11], 64
        $region60: #{tpu_custom_call.1} parent=39 // pred_fallthru
          _
        %270 = sfence
        %s271 = sand.u32 %s33, 1
        %s272 = scalar_lea.sflag [#allocation3], %s271
        %s273 = sand.u32 %s33, 1
        %s274 = smul.addr %s273, 8
        %s275 = scalar_lea.vmem [#allocation2], %s274
        %p276 = pneg %p46
        %p277 = pneg %p43
        %p278 = pneg %p67
        %p279 = pneg %p64
        %p280 = pneg %p88
        %p281 = pneg %p85
        %p282 = pneg %p109
        %p283 = pneg %p106
        %p284 = pneg %p130
        %p285 = pneg %p127
        %p286 = pneg %p156
        %p287 = pneg %p153
        %s288 = sand.u32 %s143, 1
        %s289 = scalar_lea.sflag [#allocation4], %s288
        %s290 = sand.u32 %s143, 1
        %s291 = smul.addr %s290, 8
        %s292 = scalar_lea.vmem [#allocation12], %s291
        %v293 = vld [vmem:[%s249] sm:$0xff]
        %s294 = sld [smem:[#allocation6]]
        %v295 = vstv %s294
        %v296 = vmul.f32 %v295, %v293
        %s297 = sld [smem:[#allocation6 + $0x1]]
        %v298 = vstv %s297
        %v299 = vmul.f32 %v298, %v293
        %v301 = vrot.slane %v299, 5
        %v302 = vrot.slane %v301, 4
        %v304 = vadd.f32 %v296, %v302
        %s305 = sld [smem:[#allocation6 + $0x2]]
        %v306 = vstv %s305
        %v307 = vmul.f32 %v306, %v293
        %v309 = vrot.slane %v307, 6
        %v310 = vrot.slane %v309, 4
        %v312 = vadd.f32 %v304, %v310
        %s313 = sld [smem:[#allocation6 + $0x3]]
        %v314 = vstv %s313
        %v315 = vmul.f32 %v314, %v293
        %v317 = vrot.slane %v315, 7
        %v318 = vrot.slane %v317, 4
        %v320 = vadd.f32 %v312, %v318
        %s321 = sld [smem:[#allocation6 + $0x80]]
        %v322 = vstv %s321
        %v323 = vmul.f32 %v322, %v293
        %s324 = sld [smem:[#allocation6 + $0x81]]
        %v325 = vstv %s324
        %v326 = vmul.f32 %v325, %v293
        %v328 = vrot.slane %v326, 5
        %v329 = vrot.slane %v328, 4
        %v331 = vadd.f32 %v323, %v329
        %s332 = sld [smem:[#allocation6 + $0x82]]
        %v333 = vstv %s332
        %v334 = vmul.f32 %v333, %v293
        %v336 = vrot.slane %v334, 6
        %v337 = vrot.slane %v336, 4
        %v339 = vadd.f32 %v331, %v337
        %s340 = sld [smem:[#allocation6 + $0x83]]
        %v341 = vstv %s340
        %v342 = vmul.f32 %v341, %v293
        %v344 = vrot.slane %v342, 7
        %v345 = vrot.slane %v344, 4
        %v347 = vadd.f32 %v339, %v345
        %v349 = vrot.slane %v293, 4
        %v351 = vmul.f32 %v295, %v349
        %v352 = vmul.f32 %v298, %v349
        %v354 = vrot.slane %v352, 5
        %v355 = vrot.slane %v354, 4
        %v357 = vadd.f32 %v351, %v355
        %v358 = vmul.f32 %v306, %v349
        %v360 = vrot.slane %v358, 6
        %v361 = vrot.slane %v360, 4
        %v363 = vadd.f32 %v357, %v361
        %v364 = vmul.f32 %v314, %v349
        %v366 = vrot.slane %v364, 7
        %v367 = vrot.slane %v366, 4
        %v369 = vadd.f32 %v363, %v367
        %v370 = vmul.f32 %v322, %v349
        %v371 = vmul.f32 %v325, %v349
        %v373 = vrot.slane %v371, 5
        %v374 = vrot.slane %v373, 4
        %v376 = vadd.f32 %v370, %v374
        %v377 = vmul.f32 %v333, %v349
        %v379 = vrot.slane %v377, 6
        %v380 = vrot.slane %v379, 4
        %v382 = vadd.f32 %v376, %v380
        %v383 = vmul.f32 %v341, %v349
        %v385 = vrot.slane %v383, 7
        %v386 = vrot.slane %v385, 4
        %v388 = vadd.f32 %v382, %v386
        %v390 = vlaneseq
        %v391 = vshrl.u32 %v390, 7
        %v392 = vsub.s32 0, %v391
        %v393 = vrot.slane %v347, %v392
        %v396 = vlaneseq
        %v397 = vshrl.u32 %v396, 7
        %v398 = vsub.s32 0, %v397
        %v399 = vrot.slane %v369, %v398
        %v402 = vlaneseq
        %v403 = vshrl.u32 %v402, 7
        %v404 = vsub.s32 0, %v403
        %v405 = vrot.slane %v388, %v404
        %vm407 = vcmask 1040384
        %v408 = vsel %vm407, %v320, %v393
        %vm409 = vcmask 1041408
        %v410 = vsel %vm409, %v408, %v399
        %vm411 = vcmask 1042432
        %v412 = vsel %vm411, %v410, %v405
        %s413 = sld [smem:[#allocation7]]
        %v414 = vstv %s413
        %v415 = vmul.f32 %v414, %v293
        %s416 = sld [smem:[#allocation7 + $0x1]]
        %v417 = vstv %s416
        %v418 = vmul.f32 %v417, %v293
        %v420 = vrot.slane %v418, 5
        %v421 = vrot.slane %v420, 4
        %v423 = vadd.f32 %v415, %v421
        %s424 = sld [smem:[#allocation7 + $0x2]]
        %v425 = vstv %s424
        %v426 = vmul.f32 %v425, %v293
        %v428 = vrot.slane %v426, 6
        %v429 = vrot.slane %v428, 4
        %v431 = vadd.f32 %v423, %v429
        %s432 = sld [smem:[#allocation7 + $0x3]]
        %v433 = vstv %s432
        %v434 = vmul.f32 %v433, %v293
        %v436 = vrot.slane %v434, 7
        %v437 = vrot.slane %v436, 4
        %v439 = vadd.f32 %v431, %v437
        %s440 = sld [smem:[#allocation7 + $0x80]]
        %v441 = vstv %s440
        %v442 = vmul.f32 %v441, %v293
        %s443 = sld [smem:[#allocation7 + $0x81]]
        %v444 = vstv %s443
        %v445 = vmul.f32 %v444, %v293
        %v447 = vrot.slane %v445, 5
        %v448 = vrot.slane %v447, 4
        %v450 = vadd.f32 %v442, %v448
        %s451 = sld [smem:[#allocation7 + $0x82]]
        %v452 = vstv %s451
        %v453 = vmul.f32 %v452, %v293
        %v455 = vrot.slane %v453, 6
        %v456 = vrot.slane %v455, 4
        %v458 = vadd.f32 %v450, %v456
        %s459 = sld [smem:[#allocation7 + $0x83]]
        %v460 = vstv %s459
        %v461 = vmul.f32 %v460, %v293
        %v463 = vrot.slane %v461, 7
        %v464 = vrot.slane %v463, 4
        %v466 = vadd.f32 %v458, %v464
        %v467 = vmul.f32 %v414, %v349
        %v468 = vmul.f32 %v417, %v349
        %v470 = vrot.slane %v468, 5
        %v471 = vrot.slane %v470, 4
        %v473 = vadd.f32 %v467, %v471
        %v474 = vmul.f32 %v425, %v349
        %v476 = vrot.slane %v474, 6
        %v477 = vrot.slane %v476, 4
        %v479 = vadd.f32 %v473, %v477
        %v480 = vmul.f32 %v433, %v349
        %v482 = vrot.slane %v480, 7
        %v483 = vrot.slane %v482, 4
        %v485 = vadd.f32 %v479, %v483
        %v486 = vmul.f32 %v441, %v349
        %v487 = vmul.f32 %v444, %v349
        %v489 = vrot.slane %v487, 5
        %v490 = vrot.slane %v489, 4
        %v492 = vadd.f32 %v486, %v490
        %v493 = vmul.f32 %v452, %v349
        %v495 = vrot.slane %v493, 6
        %v496 = vrot.slane %v495, 4
        %v498 = vadd.f32 %v492, %v496
        %v499 = vmul.f32 %v460, %v349
        %v501 = vrot.slane %v499, 7
        %v502 = vrot.slane %v501, 4
        %v504 = vadd.f32 %v498, %v502
        %v506 = vlaneseq
        %v507 = vshrl.u32 %v506, 7
        %v508 = vsub.s32 0, %v507
        %v509 = vrot.slane %v466, %v508
        %v512 = vlaneseq
        %v513 = vshrl.u32 %v512, 7
        %v514 = vsub.s32 0, %v513
        %v515 = vrot.slane %v485, %v514
        %v518 = vlaneseq
        %v519 = vshrl.u32 %v518, 7
        %v520 = vsub.s32 0, %v519
        %v521 = vrot.slane %v504, %v520
        %v523 = vsel %vm407, %v439, %v509
        %v524 = vsel %vm409, %v523, %v515
        %v525 = vsel %vm411, %v524, %v521
        %s526 = sld [smem:[#allocation9]]
        %v527 = vstv %s526
        %v528 = vmul.f32 %v527, %v293
        %s529 = sld [smem:[#allocation9 + $0x1]]
        %v530 = vstv %s529
        %v531 = vmul.f32 %v530, %v293
        %v533 = vrot.slane %v531, 5
        %v534 = vrot.slane %v533, 4
        %v536 = vadd.f32 %v528, %v534
        %s537 = sld [smem:[#allocation9 + $0x2]]
        %v538 = vstv %s537
        %v539 = vmul.f32 %v538, %v293
        %v541 = vrot.slane %v539, 6
        %v542 = vrot.slane %v541, 4
        %v544 = vadd.f32 %v536, %v542
        %s545 = sld [smem:[#allocation9 + $0x3]]
        %v546 = vstv %s545
        %v547 = vmul.f32 %v546, %v293
        %v549 = vrot.slane %v547, 7
        %v550 = vrot.slane %v549, 4
        %v552 = vadd.f32 %v544, %v550
        %s553 = sld [smem:[#allocation9 + $0x80]]
        %v554 = vstv %s553
        %v555 = vmul.f32 %v554, %v293
        %s556 = sld [smem:[#allocation9 + $0x81]]
        %v557 = vstv %s556
        %v558 = vmul.f32 %v557, %v293
        %v560 = vrot.slane %v558, 5
        %v561 = vrot.slane %v560, 4
        %v563 = vadd.f32 %v555, %v561
        %s564 = sld [smem:[#allocation9 + $0x82]]
        %v565 = vstv %s564
        %v566 = vmul.f32 %v565, %v293
        %v568 = vrot.slane %v566, 6
        %v569 = vrot.slane %v568, 4
        %v571 = vadd.f32 %v563, %v569
        %s572 = sld [smem:[#allocation9 + $0x83]]
        %v573 = vstv %s572
        %v574 = vmul.f32 %v573, %v293
        %v576 = vrot.slane %v574, 7
        %v577 = vrot.slane %v576, 4
        %v579 = vadd.f32 %v571, %v577
        %v580 = vmul.f32 %v527, %v349
        %v581 = vmul.f32 %v530, %v349
        %v583 = vrot.slane %v581, 5
        %v584 = vrot.slane %v583, 4
        %v586 = vadd.f32 %v580, %v584
        %v587 = vmul.f32 %v538, %v349
        %v589 = vrot.slane %v587, 6
        %v590 = vrot.slane %v589, 4
        %v592 = vadd.f32 %v586, %v590
        %v593 = vmul.f32 %v546, %v349
        %v595 = vrot.slane %v593, 7
        %v596 = vrot.slane %v595, 4
        %v598 = vadd.f32 %v592, %v596
        %v599 = vmul.f32 %v554, %v349
        %v600 = vmul.f32 %v557, %v349
        %v602 = vrot.slane %v600, 5
        %v603 = vrot.slane %v602, 4
        %v605 = vadd.f32 %v599, %v603
        %v606 = vmul.f32 %v565, %v349
        %v608 = vrot.slane %v606, 6
        %v609 = vrot.slane %v608, 4
        %v611 = vadd.f32 %v605, %v609
        %v612 = vmul.f32 %v573, %v349
        %v614 = vrot.slane %v612, 7
        %v615 = vrot.slane %v614, 4
        %v617 = vadd.f32 %v611, %v615
        %v619 = vlaneseq
        %v620 = vshrl.u32 %v619, 7
        %v621 = vsub.s32 0, %v620
        %v622 = vrot.slane %v579, %v621
        %v625 = vlaneseq
        %v626 = vshrl.u32 %v625, 7
        %v627 = vsub.s32 0, %v626
        %v628 = vrot.slane %v598, %v627
        %v631 = vlaneseq
        %v632 = vshrl.u32 %v631, 7
        %v633 = vsub.s32 0, %v632
        %v634 = vrot.slane %v617, %v633
        %v636 = vsel %vm407, %v552, %v622
        %v637 = vsel %vm409, %v636, %v628
        %v638 = vsel %vm411, %v637, %v634
        %639 = vxpose.xlu0.b32.start [1/16] %v525, 128
        %640 = vxpose.xlu0.b32.cont [2/16] 0.0, 128
        %641 = vxpose.xlu0.b32.cont [3/16] 0.0, 128
        %642 = vxpose.xlu0.b32.cont [4/16] 0.0, 128
        %643 = vxpose.xlu0.b32.cont [5/16] 0.0, 128
        %644 = vxpose.xlu0.b32.cont [6/16] 0.0, 128
        %645 = vxpose.xlu0.b32.cont [7/16] 0.0, 128
        %646 = vxpose.xlu0.b32.cont [8/16] 0.0, 128
        %647 = vxpose.xlu0.b32.cont [9/16] 0.0, 128
        %648 = vxpose.xlu0.b32.cont [10/16] 0.0, 128
        %649 = vxpose.xlu0.b32.cont [11/16] 0.0, 128
        %650 = vxpose.xlu0.b32.cont [12/16] 0.0, 128
        %651 = vxpose.xlu0.b32.cont [13/16] 0.0, 128
        %652 = vxpose.xlu0.b32.cont [14/16] 0.0, 128
        %653 = vxpose.xlu0.b32.cont [15/16] 0.0, 128
        %654 = vxpose.xlu0.b32.end [16/16] 0.0, 128
        %v655 = vpop.trf.xlu0
        %v656 = vpop.trf.xlu0
        %v657 = vpop.trf.xlu0
        %v658 = vpop.trf.xlu0
        %v659 = vpop.trf.xlu0
        %v660 = vpop.trf.xlu0
        %v661 = vpop.trf.xlu0
        %v662 = vpop.trf.xlu0
        %v663 = vpop.trf.xlu0
        %v664 = vpop.trf.xlu0
        %v665 = vpop.trf.xlu0
        %v666 = vpop.trf.xlu0
        %v667 = vpop.trf.xlu0
        %v668 = vpop.trf.xlu0
        %v669 = vpop.trf.xlu0
        %v670 = vpop.trf.xlu0
        %vm671 = vcmask 31744
        %v673 = vsel %vm671, %v655, 0
        %v676 = vsel %vm671, %v656, 0
        %v679 = vsel %vm671, %v657, 0
        %v682 = vsel %vm671, %v658, 0
        %v685 = vsel %vm671, %v659, 0
        %v688 = vsel %vm671, %v660, 0
        %v691 = vsel %vm671, %v661, 0
        %v694 = vsel %vm671, %v662, 0
        %v697 = vsel %vm671, %v663, 0
        %v700 = vsel %vm671, %v664, 0
        %v703 = vsel %vm671, %v665, 0
        %v706 = vsel %vm671, %v666, 0
        %v709 = vsel %vm671, %v667, 0
        %v712 = vsel %vm671, %v668, 0
        %v715 = vsel %vm671, %v669, 0
        %v718 = vsel %vm671, %v670, 0
        %vm720 = vcmask 1043456
        %v722 = vsel %vm720, %v412, 0
        %724 = vmatprep.subr.mxu0 0.0
        %725 = vmatpush1.msra.mxu0 %v722
        %726 = vmatprep.subr.mxu0 0.0
        %727 = vmatpush1.msra.mxu0 0.0
        %728 = vmatprep.subr.mxu0 0.0
        %729 = vmatpush1.msra.mxu0 0.0
        %730 = vmatprep.subr.mxu0 0.0
        %731 = vmatpush1.msra.mxu0 0.0
        %732 = vmatprep.subr.mxu0 0.0
        %733 = vmatpush1.msra.mxu0 0.0
        %734 = vmatprep.subr.mxu0 0.0
        %735 = vmatpush1.msra.mxu0 0.0
        %736 = vmatprep.subr.mxu0 0.0
        %737 = vmatpush1.msra.mxu0 0.0
        %738 = vmatprep.subr.mxu0 0.0
        %739 = vmatpush1.msra.mxu0 0.0
        %740 = vmatprep.subr.mxu0 0.0
        %741 = vmatpush1.msra.mxu0 0.0
        %742 = vmatprep.subr.mxu0 0.0
        %743 = vmatpush1.msra.mxu0 0.0
        %744 = vmatprep.subr.mxu0 0.0
        %745 = vmatpush1.msra.mxu0 0.0
        %746 = vmatprep.subr.mxu0 0.0
        %747 = vmatpush1.msra.mxu0 0.0
        %748 = vmatprep.subr.mxu0 0.0
        %749 = vmatpush1.msra.mxu0 0.0
        %750 = vmatprep.subr.mxu0 0.0
        %751 = vmatpush1.msra.mxu0 0.0
        %752 = vmatprep.subr.mxu0 0.0
        %753 = vmatpush1.msra.mxu0 0.0
        %754 = vmatprep.subr.mxu0 0.0
        %755 = vmatpush1.msra.mxu0 0.0
        %756 = vmatprep.subr.mxu0 0.0
        %757 = vmatpush1.msra.mxu0 0.0
        %758 = vmatprep.subr.mxu0 0.0
        %759 = vmatpush1.msra.mxu0 0.0
        %760 = vmatprep.subr.mxu0 0.0
        %761 = vmatpush1.msra.mxu0 0.0
        %762 = vmatprep.subr.mxu0 0.0
        %763 = vmatpush1.msra.mxu0 0.0
        %764 = vmatprep.subr.mxu0 0.0
        %765 = vmatpush1.msra.mxu0 0.0
        %766 = vmatprep.subr.mxu0 0.0
        %767 = vmatpush1.msra.mxu0 0.0
        %768 = vmatprep.subr.mxu0 0.0
        %769 = vmatpush1.msra.mxu0 0.0
        %770 = vmatprep.subr.mxu0 0.0
        %771 = vmatpush1.msra.mxu0 0.0
        %772 = vmatprep.subr.mxu0 0.0
        %773 = vmatpush1.msra.mxu0 0.0
        %774 = vmatprep.subr.mxu0 0.0
        %775 = vmatpush1.msra.mxu0 0.0
        %776 = vmatprep.subr.mxu0 0.0
        %777 = vmatpush1.msra.mxu0 0.0
        %778 = vmatprep.subr.mxu0 0.0
        %779 = vmatpush1.msra.mxu0 0.0
        %780 = vmatprep.subr.mxu0 0.0
        %781 = vmatpush1.msra.mxu0 0.0
        %782 = vmatprep.subr.mxu0 0.0
        %783 = vmatpush1.msra.mxu0 0.0
        %784 = vmatprep.subr.mxu0 0.0
        %785 = vmatpush1.msra.mxu0 0.0
        %786 = vmatprep.subr.mxu0 0.0
        %787 = vmatpush1.msra.mxu0 0.0
        %788 = vmatprep.mubr.f32.mxu0 0.0
        %789 = vmatmul.mubr.f32.gmra.mrb[0].mxu0 %v673
        %v790 = vpop.f32.mrb[0].mxu0
        %v791 = vadd.f32 0.0, %v790
        %v792 = vpop.f32.mrb[0].mxu0
        %793 = vmatprep.mubr.f32.mxu0 0.0
        %794 = vmatmul.mubr.f32.gmra.mrb[0].mxu0 %v676
        %v795 = vpop.f32.mrb[0].mxu0
        %v796 = vadd.f32 0.0, %v795
        %v797 = vpop.f32.mrb[0].mxu0
        %798 = vmatprep.mubr.f32.mxu0 0.0
        %799 = vmatmul.mubr.f32.gmra.mrb[0].mxu0 %v679
        %v800 = vpop.f32.mrb[0].mxu0
        %v801 = vadd.f32 0.0, %v800
        %v802 = vpop.f32.mrb[0].mxu0
        %803 = vmatprep.mubr.f32.mxu0 0.0
        %804 = vmatmul.mubr.f32.gmra.mrb[0].mxu0 %v682
        %v805 = vpop.f32.mrb[0].mxu0
        %v806 = vadd.f32 0.0, %v805
        %v807 = vpop.f32.mrb[0].mxu0
        %808 = vmatprep.mubr.f32.mxu0 0.0
        %809 = vmatmul.mubr.f32.gmra.mrb[0].mxu0 %v685
        %v810 = vpop.f32.mrb[0].mxu0
        %v811 = vadd.f32 0.0, %v810
        %v812 = vpop.f32.mrb[0].mxu0
        %813 = vmatprep.mubr.f32.mxu0 0.0
        %814 = vmatmul.mubr.f32.gmra.mrb[0].mxu0 %v688
        %v815 = vpop.f32.mrb[0].mxu0
        %v816 = vadd.f32 0.0, %v815
        %v817 = vpop.f32.mrb[0].mxu0
        %818 = vmatprep.mubr.f32.mxu0 0.0
        %819 = vmatmul.mubr.f32.gmra.mrb[0].mxu0 %v691
        %v820 = vpop.f32.mrb[0].mxu0
        %v821 = vadd.f32 0.0, %v820
        %v822 = vpop.f32.mrb[0].mxu0
        %823 = vmatprep.mubr.f32.mxu0 0.0
        %824 = vmatmul.mubr.f32.gmra.mrb[0].mxu0 %v694
        %v825 = vpop.f32.mrb[0].mxu0
        %v826 = vadd.f32 0.0, %v825
        %v827 = vpop.f32.mrb[0].mxu0
        %828 = vmatprep.mubr.f32.mxu0 0.0
        %829 = vmatmul.mubr.f32.gmra.mrb[0].mxu0 %v697
        %v830 = vpop.f32.mrb[0].mxu0
        %v831 = vadd.f32 0.0, %v830
        %v832 = vpop.f32.mrb[0].mxu0
        %833 = vmatprep.mubr.f32.mxu0 0.0
        %834 = vmatmul.mubr.f32.gmra.mrb[0].mxu0 %v700
        %v835 = vpop.f32.mrb[0].mxu0
        %v836 = vadd.f32 0.0, %v835
        %v837 = vpop.f32.mrb[0].mxu0
        %838 = vmatprep.mubr.f32.mxu0 0.0
        %839 = vmatmul.mubr.f32.gmra.mrb[0].mxu0 %v703
        %v840 = vpop.f32.mrb[0].mxu0
        %v841 = vadd.f32 0.0, %v840
        %v842 = vpop.f32.mrb[0].mxu0
        %843 = vmatprep.mubr.f32.mxu0 0.0
        %844 = vmatmul.mubr.f32.gmra.mrb[0].mxu0 %v706
        %v845 = vpop.f32.mrb[0].mxu0
        %v846 = vadd.f32 0.0, %v845
        %v847 = vpop.f32.mrb[0].mxu0
        %848 = vmatprep.mubr.f32.mxu0 0.0
        %849 = vmatmul.mubr.f32.gmra.mrb[0].mxu0 %v709
        %v850 = vpop.f32.mrb[0].mxu0
        %v851 = vadd.f32 0.0, %v850
        %v852 = vpop.f32.mrb[0].mxu0
        %853 = vmatprep.mubr.f32.mxu0 0.0
        %854 = vmatmul.mubr.f32.gmra.mrb[0].mxu0 %v712
        %v855 = vpop.f32.mrb[0].mxu0
        %v856 = vadd.f32 0.0, %v855
        %v857 = vpop.f32.mrb[0].mxu0
        %858 = vmatprep.mubr.f32.mxu0 0.0
        %859 = vmatmul.mubr.f32.gmra.mrb[0].mxu0 %v715
        %v860 = vpop.f32.mrb[0].mxu0
        %v861 = vadd.f32 0.0, %v860
        %v862 = vpop.f32.mrb[0].mxu0
        %863 = vmatprep.mubr.f32.mxu0 0.0
        %864 = vmatmul.mubr.f32.gmra.mrb[0].mxu0 %v718
        %v865 = vpop.f32.mrb[0].mxu0
        %v866 = vadd.f32 0.0, %v865
        %v867 = vpop.f32.mrb[0].mxu0
        %868 = vdwg.mxu0
        %v869 = vmax.f32 %v791, %v811
        %v870 = vmax.f32 %v796, %v816
        %v871 = vmax.f32 %v801, %v821
        %v872 = vmax.f32 %v806, %v826
        %v873 = vmax.f32 %v869, %v831
        %v874 = vmax.f32 %v870, %v836
        %v875 = vmax.f32 %v871, %v841
        %v876 = vmax.f32 %v872, %v846
        %v877 = vmax.f32 %v873, %v851
        %v878 = vmax.f32 %v874, %v856
        %v879 = vmax.f32 %v875, %v861
        %v880 = vmax.f32 %v876, %v866
        %v881 = vmax.f32 %v877, %v878
        %v882 = vmax.f32 %v879, %v880
        %v883 = vmax.f32 %v881, %v882
        %v884 = vrot.slane %v883, 4
        %v885 = vmax.f32 %v883, %v884
        %v886 = vrot.slane %v885, 2
        %v887 = vmax.f32 %v885, %v886
        %v888 = vrot.slane %v887, 1
        %v889 = vmax.f32 %v887, %v888
        %v890 = vsub.f32 %v791, %v889
        %v891 = vsub.f32 %v796, %v889
        %v892 = vsub.f32 %v801, %v889
        %v893 = vsub.f32 %v806, %v889
        %v894 = vsub.f32 %v811, %v889
        %v895 = vsub.f32 %v816, %v889
        %v896 = vsub.f32 %v821, %v889
        %v897 = vsub.f32 %v826, %v889
        %v898 = vsub.f32 %v831, %v889
        %v899 = vsub.f32 %v836, %v889
        %v900 = vsub.f32 %v841, %v889
        %v901 = vsub.f32 %v846, %v889
        %v902 = vsub.f32 %v851, %v889
        %v903 = vsub.f32 %v856, %v889
        %v904 = vsub.f32 %v861, %v889
        %v905 = vsub.f32 %v866, %v889
        %v906 = vmul.f32 %v890, 1.442695
        %v907 = vpow.pop %v906
        %v908 = vmul.f32 %v891, 1.442695
        %v909 = vpow.pop %v908
        %v910 = vmul.f32 %v892, 1.442695
        %v911 = vpow.pop %v910
        %v912 = vmul.f32 %v893, 1.442695
        %v913 = vpow.pop %v912
        %v914 = vmul.f32 %v894, 1.442695
        %v915 = vpow.pop %v914
        %v916 = vmul.f32 %v895, 1.442695
        %v917 = vpow.pop %v916
        %v918 = vmul.f32 %v896, 1.442695
        %v919 = vpow.pop %v918
        %v920 = vmul.f32 %v897, 1.442695
        %v921 = vpow.pop %v920
        %v922 = vmul.f32 %v898, 1.442695
        %v923 = vpow.pop %v922
        %v924 = vmul.f32 %v899, 1.442695
        %v925 = vpow.pop %v924
        %v926 = vmul.f32 %v900, 1.442695
        %v927 = vpow.pop %v926
        %v928 = vmul.f32 %v901, 1.442695
        %v929 = vpow.pop %v928
        %v930 = vmul.f32 %v902, 1.442695
        %v931 = vpow.pop %v930
        %v932 = vmul.f32 %v903, 1.442695
        %v933 = vpow.pop %v932
        %v934 = vmul.f32 %v904, 1.442695
        %v935 = vpow.pop %v934
        %v936 = vmul.f32 %v905, 1.442695
        %v937 = vpow.pop %v936
        %v938 = vadd.f32 %v907, %v909
        %v939 = vadd.f32 %v938, %v911
        %v940 = vadd.f32 %v939, %v913
        %v941 = vadd.f32 %v940, %v915
        %v942 = vadd.f32 %v941, %v917
        %v943 = vadd.f32 %v942, %v919
        %v944 = vadd.f32 %v943, %v921
        %v945 = vadd.f32 %v944, %v923
        %v946 = vadd.f32 %v945, %v925
        %v947 = vadd.f32 %v946, %v927
        %v948 = vadd.f32 %v947, %v929
        %v949 = vadd.f32 %v948, %v931
        %v950 = vadd.f32 %v949, %v933
        %v951 = vadd.f32 %v950, %v935
        %v952 = vadd.f32 %v951, %v937
        %v953 = vrot.slane %v952, 4
        %v954 = vadd.f32 %v952, %v953
        %v955 = vrot.slane %v954, 2
        %v956 = vadd.f32 %v954, %v955
        %v957 = vrot.slane %v956, 1
        %v958 = vadd.f32 %v956, %v957
        %v959 = vrcp.pop %v958
        %v960 = vmul.f32 %v907, %v959
        %v961 = vmul.f32 %v909, %v959
        %v962 = vmul.f32 %v911, %v959
        %v963 = vmul.f32 %v913, %v959
        %v964 = vmul.f32 %v915, %v959
        %v965 = vmul.f32 %v917, %v959
        %v966 = vmul.f32 %v919, %v959
        %v967 = vmul.f32 %v921, %v959
        %v968 = vmul.f32 %v923, %v959
        %v969 = vmul.f32 %v925, %v959
        %v970 = vmul.f32 %v927, %v959
        %v971 = vmul.f32 %v929, %v959
        %v972 = vmul.f32 %v931, %v959
        %v973 = vmul.f32 %v933, %v959
        %v974 = vmul.f32 %v935, %v959
        %v975 = vmul.f32 %v937, %v959
        %976 = vmatprep.subr.mxu0 0.0
        %977 = vmatpush1.xpose.msra.mxu0 %v960
        %978 = vmatprep.subr.mxu0 0.0
        %979 = vmatpush1.xpose.msra.mxu0 %v961
        %980 = vmatprep.subr.mxu0 0.0
        %981 = vmatpush1.xpose.msra.mxu0 %v962
        %982 = vmatprep.subr.mxu0 0.0
        %983 = vmatpush1.xpose.msra.mxu0 %v963
        %984 = vmatprep.subr.mxu0 0.0
        %985 = vmatpush1.xpose.msra.mxu0 %v964
        %986 = vmatprep.subr.mxu0 0.0
        %987 = vmatpush1.xpose.msra.mxu0 %v965
        %988 = vmatprep.subr.mxu0 0.0
        %989 = vmatpush1.xpose.msra.mxu0 %v966
        %990 = vmatprep.subr.mxu0 0.0
        %991 = vmatpush1.xpose.msra.mxu0 %v967
        %992 = vmatprep.subr.mxu0 0.0
        %993 = vmatpush1.xpose.msra.mxu0 %v968
        %994 = vmatprep.subr.mxu0 0.0
        %995 = vmatpush1.xpose.msra.mxu0 %v969
        %996 = vmatprep.subr.mxu0 0.0
        %997 = vmatpush1.xpose.msra.mxu0 %v970
        %998 = vmatprep.subr.mxu0 0.0
        %999 = vmatpush1.xpose.msra.mxu0 %v971
        %1000 = vmatprep.subr.mxu0 0.0
        %1001 = vmatpush1.xpose.msra.mxu0 %v972
        %1002 = vmatprep.subr.mxu0 0.0
        %1003 = vmatpush1.xpose.msra.mxu0 %v973
        %1004 = vmatprep.subr.mxu0 0.0
        %1005 = vmatpush1.xpose.msra.mxu0 %v974
        %1006 = vmatprep.subr.mxu0 0.0
        %1007 = vmatpush1.xpose.msra.mxu0 %v975
        %1008 = vmatprep.subr.mxu0 0.0
        %1009 = vmatpush1.xpose.msra.mxu0 0.0
        %1010 = vmatprep.subr.mxu0 0.0
        %1011 = vmatpush1.xpose.msra.mxu0 0.0
        %1012 = vmatprep.subr.mxu0 0.0
        %1013 = vmatpush1.xpose.msra.mxu0 0.0
        %1014 = vmatprep.subr.mxu0 0.0
        %1015 = vmatpush1.xpose.msra.mxu0 0.0
        %1016 = vmatprep.subr.mxu0 0.0
        %1017 = vmatpush1.xpose.msra.mxu0 0.0
        %1018 = vmatprep.subr.mxu0 0.0
        %1019 = vmatpush1.xpose.msra.mxu0 0.0
        %1020 = vmatprep.subr.mxu0 0.0
        %1021 = vmatpush1.xpose.msra.mxu0 0.0
        %1022 = vmatprep.subr.mxu0 0.0
        %1023 = vmatpush1.xpose.msra.mxu0 0.0
        %1024 = vmatprep.subr.mxu0 0.0
        %1025 = vmatpush1.xpose.msra.mxu0 0.0
        %1026 = vmatprep.subr.mxu0 0.0
        %1027 = vmatpush1.xpose.msra.mxu0 0.0
        %1028 = vmatprep.subr.mxu0 0.0
        %1029 = vmatpush1.xpose.msra.mxu0 0.0
        %1030 = vmatprep.subr.mxu0 0.0
        %1031 = vmatpush1.xpose.msra.mxu0 0.0
        %1032 = vmatprep.subr.mxu0 0.0
        %1033 = vmatpush1.xpose.msra.mxu0 0.0
        %1034 = vmatprep.subr.mxu0 0.0
        %1035 = vmatpush1.xpose.msra.mxu0 0.0
        %1036 = vmatprep.subr.mxu0 0.0
        %1037 = vmatpush1.xpose.msra.mxu0 0.0
        %1038 = vmatprep.subr.mxu0 0.0
        %1039 = vmatpush1.xpose.msra.mxu0 0.0
        %1040 = vmatprep.mubr.f32.mxu0 0.0
        %1041 = vmatmul.mubr.f32.gmra.mrb[0].mxu0 %v638
        %v1042 = vpop.f32.mrb[0].mxu0
        %v1043 = vadd.f32 0.0, %v1042
        %v1044 = vpop.f32.mrb[0].mxu0
        %1045 = vdwg.mxu0
        %s1046 = sld [smem:[#allocation10]]
        %v1047 = vstv %s1046
        %v1048 = vmul.f32 %v1047, %v1043
        %s1049 = sld [smem:[#allocation10 + $0x1]]
        %v1050 = vstv %s1049
        %v1051 = vmul.f32 %v1050, %v1043
        %v1053 = vrot.slane %v1051, 1
        %v1055 = vadd.f32 %v1048, %v1053
        %s1056 = sld [smem:[#allocation10 + $0x80]]
        %v1057 = vstv %s1056
        %v1058 = vmul.f32 %v1057, %v1043
        %s1059 = sld [smem:[#allocation10 + $0x81]]
        %v1060 = vstv %s1059
        %v1061 = vmul.f32 %v1060, %v1043
        %v1063 = vrot.slane %v1061, 1
        %v1065 = vadd.f32 %v1058, %v1063
        %s1066 = sld [smem:[#allocation10 + $0x100]]
        %v1067 = vstv %s1066
        %v1068 = vmul.f32 %v1067, %v1043
        %s1069 = sld [smem:[#allocation10 + $0x101]]
        %v1070 = vstv %s1069
        %v1071 = vmul.f32 %v1070, %v1043
        %v1073 = vrot.slane %v1071, 1
        %v1075 = vadd.f32 %v1068, %v1073
        %s1076 = sld [smem:[#allocation10 + $0x180]]
        %v1077 = vstv %s1076
        %v1078 = vmul.f32 %v1077, %v1043
        %s1079 = sld [smem:[#allocation10 + $0x181]]
        %v1080 = vstv %s1079
        %v1081 = vmul.f32 %v1080, %v1043
        %v1083 = vrot.slane %v1081, 1
        %v1085 = vadd.f32 %v1078, %v1083
        %v1087 = vrot.slane %v1065, 7
        %v1090 = vrot.slane %v1075, 6
        %v1093 = vrot.slane %v1085, 5
        %v1095 = vsel %vm407, %v1055, %v1087
        %v1096 = vsel %vm409, %v1095, %v1090
        %v1097 = vsel %vm411, %v1096, %v1093
        %v1099 = vrot.slane %v1055, 2
        %v1101 = vrot.slane %v1065, 1
        %v1103 = vrot.slane %v1085, 7
        %v1105 = vsel %vm407, %v1099, %v1101
        %v1106 = vsel %vm409, %v1105, %v1075
        %v1107 = vsel %vm411, %v1106, %v1103
        %v1108 = vadd.f32 %v293, %v1097
        %1109 = vst [vmem:[%s292] sm:$0xf] %v1108
        %v1110 = vadd.f32 %v349, %v1107
        %1111 = vst [vmem:[%s292 + $0x4] sm:$0xf] %v1110
        %s1112 = sand.u32 %s143, 1
        %s1113 = scalar_lea.sflag [#allocation4], %s1112
        %s1114 = sand.u32 %s143, 1
        %s1115 = smul.addr %s1114, 8
        %s1116 = scalar_lea.vmem [#allocation12], %s1115
        // Predicated region
        $region61: #{tpu_custom_call.1} parent=39 // pred_check
          %p1117 = pneg %p153
        $region62: #{tpu_custom_call.1} parent=39 // pred_check_branch
          %1119 = sbr.rel (%p1117) target = $region64
        $region63: #{tpu_custom_call.1} parent=39 // pred_region
          %s1121 = ssub.s32 128, 128
          %1122 = vsyncadd %s1113, %s1121
          %s1123 = smul.addr %s25, 2
          %s1124 = smul.addr %s1123, 64
          %s1125 = scalar_lea.hbm %s5, %s1124
          %s1127 = sshll.u32 %s1116, 4
          %s1128 = int_to_ptr.vmem [resolvable:$true] %s1127
          %1130 = dma.vmem_to_hbm [thread:$0]  %s1128, 128, %s1125, %s1113
        $region64: #{tpu_custom_call.1} parent=39 // pred_fallthru
          _
      $region40: #{tpu_custom_call.1} parent=5 // pred_fallthru
        _
      %p1131 = scmp.le.s32.totalorder 2, %s20
      // Predicated region
      $region65: #{tpu_custom_call.1} parent=5 // pred_check
        %p1132 = pneg %p1131
      $region66: #{tpu_custom_call.1} parent=5 // pred_check_branch
        %1134 = sbr.rel (%p1132) target = $region68
      $region67: #{tpu_custom_call.1} parent=5 // pred_region
        %s1135 = ssub.s32 %s20, 2
        // Predicated region
        $region69: #{tpu_custom_call.1} parent=67 // pred_check
          %p1136 = pneg %p159
        $region70: #{tpu_custom_call.1} parent=67 // pred_check_branch
          %1138 = sbr.rel (%p1136) target = $region72
        $region71: #{tpu_custom_call.1} parent=67 // pred_region
          %s1139 = sand.u32 %s144, 1
          %s1140 = scalar_lea.sflag [#allocation4], %s1139
          %s1141 = sand.u32 %s144, 1
          %s1142 = smul.addr %s1141, 8
          %s1143 = scalar_lea.vmem [#allocation12], %s1142
          %1144 = dma.done %s1140, 128
        $region72: #{tpu_custom_call.1} parent=67 // pred_fallthru
          _
      $region68: #{tpu_custom_call.1} parent=5 // pred_fallthru
        _
    $region6: #{tpu_custom_call.1} parent=1 // loop_footer
      %s24 = sadd.s32 1, %s20
    $region7: #{tpu_custom_call.1} parent=1 // loop_footer_branch
      %19 = sbr.rel target = $region3
    $region8: #{tpu_custom_call.1} parent=1 // loop_exit
      _
    %1145 = vsyncpa [#allocation3], 1
    %s1146 = scalar_lea.sflag [#allocation3], 1
    %1147 = vsyncpa %s1146, 1
    %1148 = vsyncpa [#allocation4], 1
    %s1149 = scalar_lea.sflag [#allocation4], 1
    %1150 = vsyncpa %s1149, 1
    %1151 = vsyncpa [#allocation5], 1
    %s1152 = scalar_lea.sflag [#allocation5], 1
    %1153 = vsyncpa %s1152, 1
    %1154 = vsyncpa [#allocation8], 1
    %1155 = vsyncpa [#allocation11], 1

</llo_original>
